<compile_context>
chip_gen: v7x
topology: tpu7x:2x2x1
jax: 0.10.0
libtpu: 0.0.40
codegen_flags: <defaults>
</compile_context>

<pallas_src>
import functools

import jax
import jax.numpy as jnp
from jax.experimental import pallas as pl
from jax.experimental.pallas import tpu as pltpu


# ----------------------------- kernel -----------------------------------------

def melresnet_kernel(x_ref, w_in_ref, b_in_ref,
                     w1_ref, b1_ref, w2_ref, b2_ref,
                     w_out_ref, b_out_ref, o_ref, *, res_blocks, c_out):
    x = x_ref[0]                                                   # (tile_T, K_pad) bf16

    # conv_in (im2col -> single MXU matmul) + folded BN + ReLU
    h = jnp.dot(x, w_in_ref[...], preferred_element_type=jnp.float32)
    h = jnp.maximum(h + b_in_ref[...], 0.0)                        # (tile_T, C_hid_pad) f32

    # residual blocks: static unroll (res_blocks is a small static int).
    # Elementwise chain kept minimal (bias+ReLU fused in one maximum, one residual add,
    # exactly one bf16 cast per dot input) - the kernel is VPU/ld-st bound, not MXU bound.
    for i in range(res_blocks):
        y = jnp.dot(h.astype(jnp.bfloat16), w1_ref[i],
                    preferred_element_type=jnp.float32)
        y = jnp.maximum(y + b1_ref[i], 0.0)
        y = jnp.dot(y.astype(jnp.bfloat16), w2_ref[i],
                    preferred_element_type=jnp.float32)
        h = h + y + b2_ref[i]                                      # residual + folded BN2 shift

    # conv_out (1x1) + bias; transpose on the otherwise-idle XLU (full 128-lane transpose is
    # the canonical lowering), then store ONLY the real output channels: (C_out, tile_T),
    # channels-first, last dim lane-dense.
    out = jnp.dot(h.astype(jnp.bfloat16), w_out_ref[...],
                  preferred_element_type=jnp.float32) + b_out_ref[...]
    out_t = out.T                                                  # (C_out_pad, tile_T)
    o_ref[0] = out_t[:c_out, :].astype(o_ref.dtype)                # un-padded channel store


# ----------------------------- wrapper helpers ---------------------------------

def _round_up(x, m):
    return (x + m - 1) // m * m


def _cdiv(a, b):
    return -(-a // b)


def _pad_axis(a, axis, new_size):
    pad = [(0, 0)] * a.ndim
    pad[axis] = (0, new_size - a.shape[axis])
    return jnp.pad(a, pad)


def _const_spec(block_shape, index_map):
    """Single-buffered BlockSpec for grid-invariant operands (weights / biases)."""
    try:
        return pl.BlockSpec(block_shape, index_map, pipeline_mode=pl.Buffered(1))
    except (AttributeError, TypeError):     # older jax without pipeline_mode / Buffered
        return pl.BlockSpec(block_shape, index_map)


def fold_bn(gamma, beta, mean, var, eps=1e-5):
    scale = gamma / jnp.sqrt(var + eps)
    shift = beta - mean * scale
    return scale, shift


def _pick_time_tiling(B, T_out, tile_t_max):
    """Balanced time tiles; >=2 grid programs when B == 1 (keep both v7x TCs busy)."""
    n_tiles = max(1, _cdiv(T_out, tile_t_max))
    if B * n_tiles < 2 and T_out > 128:
        n_tiles = 2
    tile_t = _round_up(_cdiv(T_out, n_tiles), 128)
    n_tiles = _cdiv(T_out, tile_t)
    return tile_t, n_tiles * tile_t


def _prepare(x_ncl, params, *, pad, res_blocks, tile_t_max=1024):
    """Layout conversion + BN folding + channel/time padding (plain JAX glue)."""
    B, C_in, T = x_ncl.shape
    k_size = 2 * pad + 1
    T_out = T - 2 * pad
    C_hid = params["conv_in_w"].shape[0]
    C_out = params["conv_out_w"].shape[0]

    K = k_size * C_in
    K_pad = _round_up(K, 128)
    C_hid_pad = _round_up(C_hid, 128)
    C_out_pad = _round_up(C_out, 128)
    tile_t, T_out_pad = _pick_time_tiling(B, T_out, tile_t_max)

    # --- im2col slab: (B, T_out_pad, K_pad), built directly in bf16 ---
    x_tlc = jnp.transpose(x_ncl, (0, 2, 1)).astype(jnp.bfloat16)   # (B, T, C_in)
    x_col = jnp.concatenate(
        [x_tlc[:, dk:dk + T_out, :] for dk in range(k_size)], axis=-1)  # (B, T_out, k*C_in)
    x_col = _pad_axis(_pad_axis(x_col, 2, K_pad), 1, T_out_pad)

    # --- conv_in weight, BN folded into columns + bias row ---
    s_in, sh_in = fold_bn(*params["bn_in"])
    w_in = jnp.transpose(params["conv_in_w"], (2, 1, 0)).reshape(K, C_hid) * s_in[None, :]
    w_in = _pad_axis(_pad_axis(w_in, 0, K_pad), 1, C_hid_pad).astype(jnp.bfloat16)
    b_in = _pad_axis(sh_in[None, :], 1, C_hid_pad).astype(jnp.float32)

    def fold_1x1(w_pt, bn):
        s, sh = fold_bn(*bn)
        w = jnp.transpose(w_pt[:, :, 0]) * s[None, :]              # (C_hid, C_hid)
        w = _pad_axis(_pad_axis(w, 0, C_hid_pad), 1, C_hid_pad).astype(jnp.bfloat16)
        b = _pad_axis(sh[None, :], 1, C_hid_pad).astype(jnp.float32)
        return w, b

    w1, b1 = zip(*[fold_1x1(params["rb_conv1_w"][i], params["rb_bn1"][i])
                   for i in range(res_blocks)])
    w2, b2 = zip(*[fold_1x1(params["rb_conv2_w"][i], params["rb_bn2"][i])
                   for i in range(res_blocks)])
    w1 = jnp.stack(w1); b1 = jnp.stack(b1)                         # (R, Cp, Cp), (R, 1, Cp)
    w2 = jnp.stack(w2); b2 = jnp.stack(b2)

    w_out = jnp.transpose(params["conv_out_w"][:, :, 0])           # (C_hid, C_out)
    w_out = _pad_axis(_pad_axis(w_out, 0, C_hid_pad), 1, C_out_pad).astype(jnp.bfloat16)
    b_out = _pad_axis(params["conv_out_b"][None, :], 1, C_out_pad).astype(jnp.float32)

    return dict(x_col=x_col, w_in=w_in, b_in=b_in, w1=w1, b1=b1, w2=w2, b2=b2,
                w_out=w_out, b_out=b_out,
                B=B, T_out=T_out, T_out_pad=T_out_pad, tile_t=tile_t,
                K_pad=K_pad, C_hid_pad=C_hid_pad, C_out=C_out, C_out_pad=C_out_pad)


def mel_resnet_forward(x_ncl, params, *, pad, res_blocks, tile_t_max=1024):
    """x_ncl: (B, in_dims, T) like PyTorch. Returns (B, res_out_dims, T_out) f32."""
    p = _prepare(x_ncl, params, pad=pad, res_blocks=res_blocks, tile_t_max=tile_t_max)
    B, tile_t = p["B"], p["tile_t"]
    T_out_pad, K_pad = p["T_out_pad"], p["K_pad"]
    C_hid_pad, C_out, C_out_pad = p["C_hid_pad"], p["C_out"], p["C_out_pad"]
    grid = (B, T_out_pad // tile_t)

    kernel = functools.partial(melresnet_kernel, res_blocks=res_blocks, c_out=C_out)

    # Advisory cost estimate so XLA schedules the custom call vs. the wrapper glue sensibly.
    flops = 2 * B * T_out_pad * (K_pad * C_hid_pad
                                 + 2 * res_blocks * C_hid_pad * C_hid_pad
                                 + C_hid_pad * C_out_pad)
    bytes_accessed = (p["x_col"].size * 2
                      + (p["w_in"].size + p["w1"].size + p["w2"].size + p["w_out"].size) * 2
                      + (p["b_in"].size + p["b1"].size + p["b2"].size + p["b_out"].size) * 4
                      + B * C_out * T_out_pad * 4)
    cost = pl.CostEstimate(flops=flops, transcendentals=0, bytes_accessed=bytes_accessed)

    out_pad = pl.pallas_call(
        kernel,
        out_shape=jax.ShapeDtypeStruct((B, C_out, T_out_pad), jnp.float32),
        grid=grid,
        in_specs=[
            pl.BlockSpec((1, tile_t, K_pad), lambda b, t: (b, t, 0)),
            _const_spec((K_pad, C_hid_pad), lambda b, t: (0, 0)),
            _const_spec((1, C_hid_pad), lambda b, t: (0, 0)),
            _const_spec((res_blocks, C_hid_pad, C_hid_pad), lambda b, t: (0, 0, 0)),
            _const_spec((res_blocks, 1, C_hid_pad), lambda b, t: (0, 0, 0)),
            _const_spec((res_blocks, C_hid_pad, C_hid_pad), lambda b, t: (0, 0, 0)),
            _const_spec((res_blocks, 1, C_hid_pad), lambda b, t: (0, 0, 0)),
            _const_spec((C_hid_pad, C_out_pad), lambda b, t: (0, 0)),
            _const_spec((1, C_out_pad), lambda b, t: (0, 0)),
        ],
        out_specs=pl.BlockSpec((1, C_out, tile_t), lambda b, t: (b, 0, t)),
        compiler_params=pltpu.CompilerParams(
            dimension_semantics=("parallel", "parallel"),
            vmem_limit_bytes=32 * 1024 * 1024),
        cost_estimate=cost,
    )(p["x_col"], p["w_in"], p["b_in"], p["w1"], p["b1"], p["w2"], p["b2"],
      p["w_out"], p["b_out"])

    # output is already channels-first and channel-exact; slice away only the time padding
    return out_pad[:, :, :p["T_out"]]


# ----------------------------- references --------------------------------------

def reference_folded_bf16(p, *, res_blocks):
    """Pure-JAX mirror of the kernel math (same folded/padded bf16 params, f32 accum)."""
    h = jnp.einsum("btk,kc->btc", p["x_col"], p["w_in"],
                   preferred_element_type=jnp.float32) + p["b_in"][None]
    h = jnp.maximum(h, 0.0)
    for i in range(res_blocks):
        y = jnp.einsum("btc,cd->btd", h.astype(jnp.bfloat16), p["w1"][i],
                       preferred_element_type=jnp.float32) + p["b1"][i][None]
        y = jnp.maximum(y, 0.0)
        y = jnp.einsum("btc,cd->btd", y.astype(jnp.bfloat16), p["w2"][i],
                       preferred_element_type=jnp.float32)
        h = h + y + p["b2"][i][None]
    out = jnp.einsum("btc,co->bto", h.astype(jnp.bfloat16), p["w_out"],
                     preferred_element_type=jnp.float32) + p["b_out"][None]
    return jnp.transpose(out, (0, 2, 1))        # (B, C_out_pad, T_out_pad)


def reference_torch_semantics(x_ncl, params, *, pad, res_blocks):
    """Pure-f32 JAX mirror of the PyTorch module in eval mode."""
    B, C_in, T = x_ncl.shape
    k_size = 2 * pad + 1
    T_out = T - 2 * pad
    x = jnp.transpose(x_ncl, (0, 2, 1)).astype(jnp.float32)
    w_in = jnp.transpose(params["conv_in_w"], (2, 1, 0))          # (k, C_in, C_hid)
    h = jnp.zeros((B, T_out, w_in.shape[-1]), jnp.float32)
    for dk in range(k_size):
        h = h + jnp.einsum("bti,ic->btc", x[:, dk:dk + T_out, :], w_in[dk])
    s, sh = fold_bn(*params["bn_in"])
    h = jnp.maximum(h * s + sh, 0.0)
    for i in range(res_blocks):
        res = h
        y = jnp.einsum("btc,cd->btd", h, jnp.transpose(params["rb_conv1_w"][i][:, :, 0]))
        s1, b1 = fold_bn(*params["rb_bn1"][i])
        y = jnp.maximum(y * s1 + b1, 0.0)
        y = jnp.einsum("btc,cd->btd", y, jnp.transpose(params["rb_conv2_w"][i][:, :, 0]))
        s2, b2 = fold_bn(*params["rb_bn2"][i])
        h = y * s2 + b2 + res
    out = jnp.einsum("btc,co->bto", h, jnp.transpose(params["conv_out_w"][:, :, 0]))
    out = out + params["conv_out_b"][None, None, :]
    return jnp.transpose(out, (0, 2, 1))


# ----------------------------- init + main --------------------------------------

def init_params(key, *, res_blocks, in_dims, compute_dims, res_out_dims, pad):
    k_size = 2 * pad + 1
    keys = iter(jax.random.split(key, 64))

    def bn(c):
        gamma = 0.5 + jax.random.uniform(next(keys), (c,), jnp.float32)
        beta = 0.1 * jax.random.normal(next(keys), (c,), jnp.float32)
        mean = 0.1 * jax.random.normal(next(keys), (c,), jnp.float32)
        var = 0.5 + jax.random.uniform(next(keys), (c,), jnp.float32)
        return (gamma, beta, mean, var)

    return {
        "conv_in_w": 0.1 * jax.random.normal(next(keys), (compute_dims, in_dims, k_size), jnp.float32),
        "bn_in": bn(compute_dims),
        "rb_conv1_w": [0.1 * jax.random.normal(next(keys), (compute_dims, compute_dims, 1), jnp.float32)
                       for _ in range(res_blocks)],
        "rb_conv2_w": [0.1 * jax.random.normal(next(keys), (compute_dims, compute_dims, 1), jnp.float32)
                       for _ in range(res_blocks)],
        "rb_bn1": [bn(compute_dims) for _ in range(res_blocks)],
        "rb_bn2": [bn(compute_dims) for _ in range(res_blocks)],
        "conv_out_w": 0.1 * jax.random.normal(next(keys), (res_out_dims, compute_dims, 1), jnp.float32),
        "conv_out_b": 0.1 * jax.random.normal(next(keys), (res_out_dims,), jnp.float32),
    }


if __name__ == "__main__":
    # MelResNet(res_blocks=3, in_dims=32, compute_dims=64, res_out_dims=32, pad=2)
    res_blocks, in_dims, compute_dims, res_out_dims, pad = 3, 32, 64, 32, 2
    B, T = 2, 32                                    # x: (B, in_dims, T) PyTorch NCL
    T_out = T - 2 * pad

    key = jax.random.PRNGKey(0)
    kx, kp = jax.random.split(key)
    x = jax.random.normal(kx, (B, in_dims, T), jnp.float32)
    params = init_params(kp, res_blocks=res_blocks, in_dims=in_dims,
                         compute_dims=compute_dims, res_out_dims=res_out_dims, pad=pad)

    out = mel_resnet_forward(x, params, pad=pad, res_blocks=res_blocks)
    out = jax.block_until_ready(out)
    assert out.shape == (B, res_out_dims, T_out), out.shape

    # tight check: same folded/padded bf16 operands, f32 accumulation
    prep = _prepare(x, params, pad=pad, res_blocks=res_blocks)
    ref_bf16 = reference_folded_bf16(prep, res_blocks=res_blocks)[:, :res_out_dims, :T_out]
    err_bf16 = float(jnp.max(jnp.abs(out - ref_bf16)))
    assert jnp.allclose(out, ref_bf16, rtol=2e-3, atol=2e-3), err_bf16

    # loose sanity check vs pure-f32 eval-mode PyTorch semantics (bf16 operand rounding)
    ref_f32 = reference_torch_semantics(x, params, pad=pad, res_blocks=res_blocks)
    err_f32 = float(jnp.max(jnp.abs(out - ref_f32)))
    assert jnp.allclose(out, ref_f32, rtol=1e-1, atol=1e-1), err_f32

    print("KERNEL_OK")
</pallas_src>

<mosaic_0001>
module attributes {stable_mosaic.version = 11 : i64} {
  func.func @melresnet_kernel(%arg0: i32, %arg1: i32, %arg2: memref<1x128x256xbf16, #tpu.memory_space<vmem>>, %arg3: memref<256x128xbf16, #tpu.memory_space<vmem>>, %arg4: memref<1x128xf32, #tpu.memory_space<vmem>>, %arg5: memref<3x128x128xbf16, #tpu.memory_space<vmem>>, %arg6: memref<3x1x128xf32, #tpu.memory_space<vmem>>, %arg7: memref<3x128x128xbf16, #tpu.memory_space<vmem>>, %arg8: memref<3x1x128xf32, #tpu.memory_space<vmem>>, %arg9: memref<128x128xbf16, #tpu.memory_space<vmem>>, %arg10: memref<1x128xf32, #tpu.memory_space<vmem>>, %arg11: memref<1x32x128xf32, #tpu.memory_space<vmem>>) attributes {dimension_semantics = [#tpu.dimension_semantics<parallel>, #tpu.dimension_semantics<parallel>], iteration_bounds = array<i64: 2, 1>, scalar_prefetch = 0 : i64, scratch_operands = 0 : i64, tpu.core_type = #tpu.core_type<tc>, window_params = [{transform_indices = @transform_0, window_bounds = array<i64: 1, 128, 256>}, {pipeline_mode = #tpu.pipeline_mode<synchronous>, transform_indices = @transform_1, window_bounds = array<i64: 256, 128>}, {pipeline_mode = #tpu.pipeline_mode<synchronous>, transform_indices = @transform_2, window_bounds = array<i64: 1, 128>}, {pipeline_mode = #tpu.pipeline_mode<synchronous>, transform_indices = @transform_3, window_bounds = array<i64: 3, 128, 128>}, {pipeline_mode = #tpu.pipeline_mode<synchronous>, transform_indices = @transform_4, window_bounds = array<i64: 3, 1, 128>}, {pipeline_mode = #tpu.pipeline_mode<synchronous>, transform_indices = @transform_5, window_bounds = array<i64: 3, 128, 128>}, {pipeline_mode = #tpu.pipeline_mode<synchronous>, transform_indices = @transform_6, window_bounds = array<i64: 3, 1, 128>}, {pipeline_mode = #tpu.pipeline_mode<synchronous>, transform_indices = @transform_7, window_bounds = array<i64: 128, 128>}, {pipeline_mode = #tpu.pipeline_mode<synchronous>, transform_indices = @transform_8, window_bounds = array<i64: 1, 128>}, {transform_indices = @transform_9, window_bounds = array<i64: 1, 32, 128>}]} {
    %c0 = arith.constant 0 : index
    %c0_0 = arith.constant 0 : index
    %c0_1 = arith.constant 0 : index
    %0 = vector.load %arg2[%c0, %c0_0, %c0_1] : memref<1x128x256xbf16, #tpu.memory_space<vmem>>, vector<1x128x256xbf16>
    %1 = vector.shape_cast %0 : vector<1x128x256xbf16> to vector<128x256xbf16>
    %c0_2 = arith.constant 0 : index
    %c0_3 = arith.constant 0 : index
    %2 = vector.load %arg3[%c0_2, %c0_3] : memref<256x128xbf16, #tpu.memory_space<vmem>>, vector<256x128xbf16>
    %cst = arith.constant dense<0.000000e+00> : vector<128x128xf32>
    %3 = tpu.matmul %1, %2, %cst {dimension_numbers = #tpu.dot_dimension_numbers<[1], [0], [0], [1], [0, 0, 1, 1], [], []>} : vector<128x256xbf16>, vector<256x128xbf16>, vector<128x128xf32> -> vector<128x128xf32>
    %c0_4 = arith.constant 0 : index
    %c0_5 = arith.constant 0 : index
    %4 = vector.load %arg4[%c0_4, %c0_5] : memref<1x128xf32, #tpu.memory_space<vmem>>, vector<1x128xf32>
    %5 = vector.broadcast %4 : vector<1x128xf32> to vector<128x128xf32>
    %6 = arith.addf %3, %5 : vector<128x128xf32>
    %cst_6 = arith.constant 0.000000e+00 : f32
    %7 = vector.broadcast %cst_6 : f32 to vector<128x128xf32>
    %8 = arith.maximumf %6, %7 : vector<128x128xf32>
    %9 = arith.truncf %8 : vector<128x128xf32> to vector<128x128xbf16>
    %c0_7 = arith.constant 0 : index
    %c0_8 = arith.constant 0 : index
    %c0_9 = arith.constant 0 : index
    %10 = vector.load %arg5[%c0_7, %c0_8, %c0_9] : memref<3x128x128xbf16, #tpu.memory_space<vmem>>, vector<1x128x128xbf16>
    %11 = vector.shape_cast %10 : vector<1x128x128xbf16> to vector<128x128xbf16>
    %cst_10 = arith.constant dense<0.000000e+00> : vector<128x128xf32>
    %12 = tpu.matmul %9, %11, %cst_10 {dimension_numbers = #tpu.dot_dimension_numbers<[1], [0], [0], [1], [0, 0, 1, 1], [], []>} : vector<128x128xbf16>, vector<128x128xbf16>, vector<128x128xf32> -> vector<128x128xf32>
    %c0_11 = arith.constant 0 : index
    %c0_12 = arith.constant 0 : index
    %c0_13 = arith.constant 0 : index
    %13 = vector.load %arg6[%c0_11, %c0_12, %c0_13] : memref<3x1x128xf32, #tpu.memory_space<vmem>>, vector<1x1x128xf32>
    %14 = vector.shape_cast %13 : vector<1x1x128xf32> to vector<1x128xf32>
    %15 = vector.broadcast %14 : vector<1x128xf32> to vector<128x128xf32>
    %16 = arith.addf %12, %15 : vector<128x128xf32>
    %cst_14 = arith.constant 0.000000e+00 : f32
    %17 = vector.broadcast %cst_14 : f32 to vector<128x128xf32>
    %18 = arith.maximumf %16, %17 : vector<128x128xf32>
    %19 = arith.truncf %18 : vector<128x128xf32> to vector<128x128xbf16>
    %c0_15 = arith.constant 0 : index
    %c0_16 = arith.constant 0 : index
    %c0_17 = arith.constant 0 : index
    %20 = vector.load %arg7[%c0_15, %c0_16, %c0_17] : memref<3x128x128xbf16, #tpu.memory_space<vmem>>, vector<1x128x128xbf16>
    %21 = vector.shape_cast %20 : vector<1x128x128xbf16> to vector<128x128xbf16>
    %cst_18 = arith.constant dense<0.000000e+00> : vector<128x128xf32>
    %22 = tpu.matmul %19, %21, %cst_18 {dimension_numbers = #tpu.dot_dimension_numbers<[1], [0], [0], [1], [0, 0, 1, 1], [], []>} : vector<128x128xbf16>, vector<128x128xbf16>, vector<128x128xf32> -> vector<128x128xf32>
    %23 = arith.addf %8, %22 : vector<128x128xf32>
    %c0_19 = arith.constant 0 : index
    %c0_20 = arith.constant 0 : index
    %c0_21 = arith.constant 0 : index
    %24 = vector.load %arg8[%c0_19, %c0_20, %c0_21] : memref<3x1x128xf32, #tpu.memory_space<vmem>>, vector<1x1x128xf32>
    %25 = vector.shape_cast %24 : vector<1x1x128xf32> to vector<1x128xf32>
    %26 = vector.broadcast %25 : vector<1x128xf32> to vector<128x128xf32>
    %27 = arith.addf %23, %26 : vector<128x128xf32>
    %28 = arith.truncf %27 : vector<128x128xf32> to vector<128x128xbf16>
    %c1 = arith.constant 1 : index
    %c0_22 = arith.constant 0 : index
    %c0_23 = arith.constant 0 : index
    %29 = vector.load %arg5[%c1, %c0_22, %c0_23] : memref<3x128x128xbf16, #tpu.memory_space<vmem>>, vector<1x128x128xbf16>
    %30 = vector.shape_cast %29 : vector<1x128x128xbf16> to vector<128x128xbf16>
    %cst_24 = arith.constant dense<0.000000e+00> : vector<128x128xf32>
    %31 = tpu.matmul %28, %30, %cst_24 {dimension_numbers = #tpu.dot_dimension_numbers<[1], [0], [0], [1], [0, 0, 1, 1], [], []>} : vector<128x128xbf16>, vector<128x128xbf16>, vector<128x128xf32> -> vector<128x128xf32>
    %c1_25 = arith.constant 1 : index
    %c0_26 = arith.constant 0 : index
    %c0_27 = arith.constant 0 : index
    %32 = vector.load %arg6[%c1_25, %c0_26, %c0_27] : memref<3x1x128xf32, #tpu.memory_space<vmem>>, vector<1x1x128xf32>
    %33 = vector.shape_cast %32 : vector<1x1x128xf32> to vector<1x128xf32>
    %34 = vector.broadcast %33 : vector<1x128xf32> to vector<128x128xf32>
    %35 = arith.addf %31, %34 : vector<128x128xf32>
    %cst_28 = arith.constant 0.000000e+00 : f32
    %36 = vector.broadcast %cst_28 : f32 to vector<128x128xf32>
    %37 = arith.maximumf %35, %36 : vector<128x128xf32>
    %38 = arith.truncf %37 : vector<128x128xf32> to vector<128x128xbf16>
    %c1_29 = arith.constant 1 : index
    %c0_30 = arith.constant 0 : index
    %c0_31 = arith.constant 0 : index
    %39 = vector.load %arg7[%c1_29, %c0_30, %c0_31] : memref<3x128x128xbf16, #tpu.memory_space<vmem>>, vector<1x128x128xbf16>
    %40 = vector.shape_cast %39 : vector<1x128x128xbf16> to vector<128x128xbf16>
    %cst_32 = arith.constant dense<0.000000e+00> : vector<128x128xf32>
    %41 = tpu.matmul %38, %40, %cst_32 {dimension_numbers = #tpu.dot_dimension_numbers<[1], [0], [0], [1], [0, 0, 1, 1], [], []>} : vector<128x128xbf16>, vector<128x128xbf16>, vector<128x128xf32> -> vector<128x128xf32>
    %42 = arith.addf %27, %41 : vector<128x128xf32>
    %c1_33 = arith.constant 1 : index
    %c0_34 = arith.constant 0 : index
    %c0_35 = arith.constant 0 : index
    %43 = vector.load %arg8[%c1_33, %c0_34, %c0_35] : memref<3x1x128xf32, #tpu.memory_space<vmem>>, vector<1x1x128xf32>
    %44 = vector.shape_cast %43 : vector<1x1x128xf32> to vector<1x128xf32>
    %45 = vector.broadcast %44 : vector<1x128xf32> to vector<128x128xf32>
    %46 = arith.addf %42, %45 : vector<128x128xf32>
    %47 = arith.truncf %46 : vector<128x128xf32> to vector<128x128xbf16>
    %c2 = arith.constant 2 : index
    %c0_36 = arith.constant 0 : index
    %c0_37 = arith.constant 0 : index
    %48 = vector.load %arg5[%c2, %c0_36, %c0_37] : memref<3x128x128xbf16, #tpu.memory_space<vmem>>, vector<1x128x128xbf16>
    %49 = vector.shape_cast %48 : vector<1x128x128xbf16> to vector<128x128xbf16>
    %cst_38 = arith.constant dense<0.000000e+00> : vector<128x128xf32>
    %50 = tpu.matmul %47, %49, %cst_38 {dimension_numbers = #tpu.dot_dimension_numbers<[1], [0], [0], [1], [0, 0, 1, 1], [], []>} : vector<128x128xbf16>, vector<128x128xbf16>, vector<128x128xf32> -> vector<128x128xf32>
    %c2_39 = arith.constant 2 : index
    %c0_40 = arith.constant 0 : index
    %c0_41 = arith.constant 0 : index
    %51 = vector.load %arg6[%c2_39, %c0_40, %c0_41] : memref<3x1x128xf32, #tpu.memory_space<vmem>>, vector<1x1x128xf32>
    %52 = vector.shape_cast %51 : vector<1x1x128xf32> to vector<1x128xf32>
    %53 = vector.broadcast %52 : vector<1x128xf32> to vector<128x128xf32>
    %54 = arith.addf %50, %53 : vector<128x128xf32>
    %cst_42 = arith.constant 0.000000e+00 : f32
    %55 = vector.broadcast %cst_42 : f32 to vector<128x128xf32>
    %56 = arith.maximumf %54, %55 : vector<128x128xf32>
    %57 = arith.truncf %56 : vector<128x128xf32> to vector<128x128xbf16>
    %c2_43 = arith.constant 2 : index
    %c0_44 = arith.constant 0 : index
    %c0_45 = arith.constant 0 : index
    %58 = vector.load %arg7[%c2_43, %c0_44, %c0_45] : memref<3x128x128xbf16, #tpu.memory_space<vmem>>, vector<1x128x128xbf16>
    %59 = vector.shape_cast %58 : vector<1x128x128xbf16> to vector<128x128xbf16>
    %cst_46 = arith.constant dense<0.000000e+00> : vector<128x128xf32>
    %60 = tpu.matmul %57, %59, %cst_46 {dimension_numbers = #tpu.dot_dimension_numbers<[1], [0], [0], [1], [0, 0, 1, 1], [], []>} : vector<128x128xbf16>, vector<128x128xbf16>, vector<128x128xf32> -> vector<128x128xf32>
    %61 = arith.addf %46, %60 : vector<128x128xf32>
    %c2_47 = arith.constant 2 : index
    %c0_48 = arith.constant 0 : index
    %c0_49 = arith.constant 0 : index
    %62 = vector.load %arg8[%c2_47, %c0_48, %c0_49] : memref<3x1x128xf32, #tpu.memory_space<vmem>>, vector<1x1x128xf32>
    %63 = vector.shape_cast %62 : vector<1x1x128xf32> to vector<1x128xf32>
    %64 = vector.broadcast %63 : vector<1x128xf32> to vector<128x128xf32>
    %65 = arith.addf %61, %64 : vector<128x128xf32>
    %66 = arith.truncf %65 : vector<128x128xf32> to vector<128x128xbf16>
    %c0_50 = arith.constant 0 : index
    %c0_51 = arith.constant 0 : index
    %67 = vector.load %arg9[%c0_50, %c0_51] : memref<128x128xbf16, #tpu.memory_space<vmem>>, vector<128x128xbf16>
    %cst_52 = arith.constant dense<0.000000e+00> : vector<128x128xf32>
    %68 = tpu.matmul %66, %67, %cst_52 {dimension_numbers = #tpu.dot_dimension_numbers<[1], [0], [0], [1], [0, 0, 1, 1], [], []>} : vector<128x128xbf16>, vector<128x128xbf16>, vector<128x128xf32> -> vector<128x128xf32>
    %c0_53 = arith.constant 0 : index
    %c0_54 = arith.constant 0 : index
    %69 = vector.load %arg10[%c0_53, %c0_54] : memref<1x128xf32, #tpu.memory_space<vmem>>, vector<1x128xf32>
    %70 = vector.broadcast %69 : vector<1x128xf32> to vector<128x128xf32>
    %71 = arith.addf %68, %70 : vector<128x128xf32>
    %72 = tpu.transpose %71, [1, 0] : vector<128x128xf32> -> vector<128x128xf32>
    %73 = vector.extract_strided_slice %72 {offsets = [0, 0], sizes = [32, 128], strides = [1, 1]} : vector<128x128xf32> to vector<32x128xf32>
    %c0_55 = arith.constant 0 : index
    %c0_56 = arith.constant 0 : index
    %c0_57 = arith.constant 0 : index
    %74 = vector.load %arg11[%c0_55, %c0_56, %c0_57] : memref<1x32x128xf32, #tpu.memory_space<vmem>>, vector<1x32x128xf32>
    %75 = vector.shape_cast %74 : vector<1x32x128xf32> to vector<32x128xf32>
    %76 = vector.shape_cast %73 : vector<32x128xf32> to vector<1x32x128xf32>
    tpu.vector_store %arg11[%c0_55, %c0_56, %c0_57], %76 {strides = array<i32>} : memref<1x32x128xf32, #tpu.memory_space<vmem>>, vector<1x32x128xf32>,
    return
  }
  func.func @transform_0(%arg0: i32, %arg1: i32) -> (i32, i32, i32) {
    %c0_i32 = arith.constant 0 : i32
    %c0_i32_0 = arith.constant 0 : i32
    return %arg0, %arg1, %c0_i32 : i32, i32, i32
  }
  func.func @transform_1(%arg0: i32, %arg1: i32) -> (i32, i32) {
    %c0_i32 = arith.constant 0 : i32
    %c0_i32_0 = arith.constant 0 : i32
    %c0_i32_1 = arith.constant 0 : i32
    return %c0_i32, %c0_i32_0 : i32, i32
  }
  func.func @transform_2(%arg0: i32, %arg1: i32) -> (i32, i32) {
    %c0_i32 = arith.constant 0 : i32
    %c0_i32_0 = arith.constant 0 : i32
    %c0_i32_1 = arith.constant 0 : i32
    return %c0_i32, %c0_i32_0 : i32, i32
  }
  func.func @transform_3(%arg0: i32, %arg1: i32) -> (i32, i32, i32) {
    %c0_i32 = arith.constant 0 : i32
    %c0_i32_0 = arith.constant 0 : i32
    %c0_i32_1 = arith.constant 0 : i32
    %c0_i32_2 = arith.constant 0 : i32
    return %c0_i32, %c0_i32_0, %c0_i32_1 : i32, i32, i32
  }
  func.func @transform_4(%arg0: i32, %arg1: i32) -> (i32, i32, i32) {
    %c0_i32 = arith.constant 0 : i32
    %c0_i32_0 = arith.constant 0 : i32
    %c0_i32_1 = arith.constant 0 : i32
    %c0_i32_2 = arith.constant 0 : i32
    return %c0_i32, %c0_i32_0, %c0_i32_1 : i32, i32, i32
  }
  func.func @transform_5(%arg0: i32, %arg1: i32) -> (i32, i32, i32) {
    %c0_i32 = arith.constant 0 : i32
    %c0_i32_0 = arith.constant 0 : i32
    %c0_i32_1 = arith.constant 0 : i32
    %c0_i32_2 = arith.constant 0 : i32
    return %c0_i32, %c0_i32_0, %c0_i32_1 : i32, i32, i32
  }
  func.func @transform_6(%arg0: i32, %arg1: i32) -> (i32, i32, i32) {
    %c0_i32 = arith.constant 0 : i32
    %c0_i32_0 = arith.constant 0 : i32
    %c0_i32_1 = arith.constant 0 : i32
    %c0_i32_2 = arith.constant 0 : i32
    return %c0_i32, %c0_i32_0, %c0_i32_1 : i32, i32, i32
  }
  func.func @transform_7(%arg0: i32, %arg1: i32) -> (i32, i32) {
    %c0_i32 = arith.constant 0 : i32
    %c0_i32_0 = arith.constant 0 : i32
    %c0_i32_1 = arith.constant 0 : i32
    return %c0_i32, %c0_i32_0 : i32, i32
  }
  func.func @transform_8(%arg0: i32, %arg1: i32) -> (i32, i32) {
    %c0_i32 = arith.constant 0 : i32
    %c0_i32_0 = arith.constant 0 : i32
    %c0_i32_1 = arith.constant 0 : i32
    return %c0_i32, %c0_i32_0 : i32, i32
  }
  func.func @transform_9(%arg0: i32, %arg1: i32) -> (i32, i32, i32) {
    %c0_i32 = arith.constant 0 : i32
    %c0_i32_0 = arith.constant 0 : i32
    return %arg0, %c0_i32, %arg1 : i32, i32, i32
  }
}

</mosaic_0001>

<llo_original>
// kernel: tpu_custom_call.1
$region0: #{tpu_custom_call.1}
  #allocation0 [shape = 'u32[]', space=smem, size = 0x4, offset = 0x4, fixed_abs, tag = 'smem constant byte address 0x4 - core index']
  #allocation1 [shape = 'u32[144,128]{1,0:T(1,128)}', space=vmem, size = 0x12000, scoped, tag = 'internal scratch']
  %s0 = inlined_call_operand.hbm [shape: bf16[2,128,256], index: 0, kind: input, shape index: {}]
  %s1 = inlined_call_operand.hbm [shape: bf16[256,128], index: 1, kind: input, shape index: {}]
  %s2 = inlined_call_operand.vmem [shape: f32[1,128], index: 2, kind: input, shape index: {}]
  %s3 = inlined_call_operand.hbm [shape: bf16[3,128,128], index: 3, kind: input, shape index: {}]
  %s4 = inlined_call_operand.vmem [shape: f32[3,1,128], index: 4, kind: input, shape index: {}]
  %s5 = inlined_call_operand.hbm [shape: bf16[3,128,128], index: 5, kind: input, shape index: {}]
  %s6 = inlined_call_operand.vmem [shape: f32[3,1,128], index: 6, kind: input, shape index: {}]
  %s7 = inlined_call_operand.hbm [shape: bf16[128,128], index: 7, kind: input, shape index: {}]
  %s8 = inlined_call_operand.vmem [shape: f32[1,128], index: 8, kind: input, shape index: {}]
  %s9 = inlined_call_operand.hbm [shape: f32[2,32,128], index: 9, kind: output, shape index: {}]
  %s10 = sld [smem:[#allocation0]]
  $region89: #{tpu_custom_call.1} parent=0
    _
  %s12 = ssub.s32 1, %s10
  %s13 = scalar_select 0, %s12, %s10
  $region1: #{tpu_custom_call.1} parent=0
    #allocation2 [shape = 'u8[131072]{0}', space=vmem, size = 0x20000, scoped, tag = 'input window, operand 0']
    #allocation3 [shape = 's32[2]{0}', space=sflag, size = 0x8, scoped, tag = 'scoped memory for tpu_custom_call.1']
    #allocation4 [shape = 's32[2]{0}', space=sflag, size = 0x8, scoped, tag = 'scoped memory for tpu_custom_call.1']
    #allocation5 [shape = 'u8[65536]{0}', space=vmem, size = 0x10000, scoped, tag = 'input window, operand 1, single buffered']
    #allocation6 [shape = 's32[1]{0}', space=sflag, size = 0x4, scoped, tag = 'scoped memory for tpu_custom_call.1']
    #allocation7 [shape = 'u8[98304]{0}', space=vmem, size = 0x18000, scoped, tag = 'input window, operand 3, single buffered']
    #allocation8 [shape = 'u8[98304]{0}', space=vmem, size = 0x18000, scoped, tag = 'input window, operand 5, single buffered']
    #allocation9 [shape = 's32[1]{0}', space=sflag, size = 0x4, scoped, tag = 'scoped memory for tpu_custom_call.1']
    #allocation10 [shape = 'u8[32768]{0}', space=vmem, size = 0x8000, scoped, tag = 'input window, operand 7, single buffered']
    #allocation11 [shape = 'u8[32768]{0}', space=vmem, size = 0x8000, scoped, tag = 'output window, operand 0']
    %14 = vsyncpa [#allocation3], 0
    %s15 = scalar_lea.sflag [#allocation3], 1
    %16 = vsyncpa %s15, 0
    %17 = vsyncpa [#allocation6], 0
    %18 = vsyncpa [#allocation9], 0
    %19 = vsyncpa [#allocation4], 0
    %s20 = scalar_lea.sflag [#allocation4], 1
    %21 = vsyncpa %s20, 0
    loop: start=0, step=1, limit=4
    $region2: #{tpu_custom_call.1} parent=1 // loop_pre_header
      _
    $region3: #{tpu_custom_call.1} parent=1 // loop_header
      %s23 = sphi 0, %s27
      %p24 = scmp.ge.s32.totalorder %s23, 4
      %s30 = sphi 0, %s42
      %s31 = sphi 0, %s38
      %s32 = sphi 0, %s30
      %s33 = sphi 0, %s31
      %s34 = sphi 0, %s32
      %s35 = sphi 0, %s33
      %s47 = sphi 0, %s49
      %s50 = sphi 0, %s47
      %s51 = sphi 0, %s50
      %s67 = sphi 0, %s51
      %s71 = sphi 0, %s71
      %s73 = sphi 0, %s71
      %s74 = sphi 0, %s73
      %s88 = sphi 0, %s74
      %s92 = sphi 0, %s92
      %s94 = sphi 0, %s92
      %s95 = sphi 0, %s94
      %s109 = sphi 0, %s95
      %s113 = sphi 0, %s113
      %s115 = sphi 0, %s113
      %s116 = sphi 0, %s115
      %s130 = sphi 0, %s116
      %s134 = sphi 0, %s134
      %s136 = sphi 0, %s134
      %s137 = sphi 0, %s136
      %s151 = sphi 0, %s137
      %s155 = sphi 0, %s155
      %s157 = sphi 0, %s155
      %s158 = sphi 0, %s157
      %s172 = sphi 0, %s158
      %s176 = sphi 0, %s176
      %s178 = sphi 0, %s176
      %s179 = sphi 0, %s178
      %s193 = sphi 0, %s179
      %s197 = sphi 0, %s197
      %s199 = sphi 0, %s197
      %s200 = sphi 0, %s199
      %s214 = sphi 0, %s200
      %s218 = sphi 0, %s218
      %s220 = sphi 0, %s218
      %s221 = sphi 0, %s220
      %s235 = sphi 0, %s221
      %s243 = sphi 0, %s245
      %s246 = sphi 0, %s243
      %s247 = sphi 0, %s246
      %s263 = sphi 0, %s247
    $region4: #{tpu_custom_call.1} parent=1 // loop_header_branch
      %26 = sbr.rel (%p24) target = $region8
    $region5: #{tpu_custom_call.1} parent=1 // loop_body
      %s28 = ssub.s32 %s23, 1
      %s29 = ssub.s32 %s23, 2
      %s36 = sadd.s32 1, %s31
      %p37 = scmp.ge.s32.totalorder %s36, 1
      %s38 = scalar_select %p37, 0, %s36
      %s39 = sadd.s32 1, %s30
      %s40 = scalar_select %p37, %s39, %s30
      %p41 = scmp.ge.s32.totalorder %s40, 2
      %s42 = scalar_select %p41, 0, %s40
      %s43 = ssub.s32 %s30, %s42
      %s44 = ssub.s32 %s31, %s38
      %s45 = sor.u32 %s43, %s44
      %p46 = scmp.eq.s32.totalorder %s45, 0
      %s48 = sadd.s32 %s47, 1
      %s49 = scalar_select %p46, %s47, %s48
      %p52 = pneg %p46
      %p53 = scmp.eq.s32.totalorder %s23, 1
      %p54 = por %p52, %p53
      %p55 = scmp.ne.s32.totalorder %s47, %s50
      %p56 = scmp.eq.s32.totalorder %s23, 0
      %p57 = por %p55, %p56
      %p58 = scmp.ne.s32.totalorder %s47, %s50
      %p59 = scmp.eq.s32.totalorder %s28, 1
      %p60 = por %p58, %p59
      %p61 = scmp.ne.s32.totalorder %s50, %s51
      %p62 = scmp.eq.s32.totalorder %s28, 0
      %p63 = por %p61, %p62
      %p64 = scmp.ne.s32.totalorder %s50, %s51
      %p65 = scmp.eq.s32.totalorder %s29, 1
      %p66 = por %p64, %p65
      %p68 = scmp.ne.s32.totalorder %s51, %s67
      %p69 = scmp.eq.s32.totalorder %s29, 0
      %p70 = por %p68, %p69
      %s72 = sadd.s32 %s71, 1
      %p75 = scmp.eq.s32.totalorder %s23, 1
      %p76 = scmp.ne.s32.totalorder %s71, %s73
      %p77 = scmp.eq.s32.totalorder %s23, 0
      %p78 = por %p76, %p77
      %p79 = scmp.ne.s32.totalorder %s71, %s73
      %p80 = scmp.eq.s32.totalorder %s28, 1
      %p81 = por %p79, %p80
      %p82 = scmp.ne.s32.totalorder %s73, %s74
      %p83 = scmp.eq.s32.totalorder %s28, 0
      %p84 = por %p82, %p83
      %p85 = scmp.ne.s32.totalorder %s73, %s74
      %p86 = scmp.eq.s32.totalorder %s29, 1
      %p87 = por %p85, %p86
      %p89 = scmp.ne.s32.totalorder %s74, %s88
      %p90 = scmp.eq.s32.totalorder %s29, 0
      %p91 = por %p89, %p90
      %s93 = sadd.s32 %s92, 1
      %p96 = scmp.eq.s32.totalorder %s23, 1
      %p97 = scmp.ne.s32.totalorder %s92, %s94
      %p98 = scmp.eq.s32.totalorder %s23, 0
      %p99 = por %p97, %p98
      %p100 = scmp.ne.s32.totalorder %s92, %s94
      %p101 = scmp.eq.s32.totalorder %s28, 1
      %p102 = por %p100, %p101
      %p103 = scmp.ne.s32.totalorder %s94, %s95
      %p104 = scmp.eq.s32.totalorder %s28, 0
      %p105 = por %p103, %p104
      %p106 = scmp.ne.s32.totalorder %s94, %s95
      %p107 = scmp.eq.s32.totalorder %s29, 1
      %p108 = por %p106, %p107
      %p110 = scmp.ne.s32.totalorder %s95, %s109
      %p111 = scmp.eq.s32.totalorder %s29, 0
      %p112 = por %p110, %p111
      %s114 = sadd.s32 %s113, 1
      %p117 = scmp.eq.s32.totalorder %s23, 1
      %p118 = scmp.ne.s32.totalorder %s113, %s115
      %p119 = scmp.eq.s32.totalorder %s23, 0
      %p120 = por %p118, %p119
      %p121 = scmp.ne.s32.totalorder %s113, %s115
      %p122 = scmp.eq.s32.totalorder %s28, 1
      %p123 = por %p121, %p122
      %p124 = scmp.ne.s32.totalorder %s115, %s116
      %p125 = scmp.eq.s32.totalorder %s28, 0
      %p126 = por %p124, %p125
      %p127 = scmp.ne.s32.totalorder %s115, %s116
      %p128 = scmp.eq.s32.totalorder %s29, 1
      %p129 = por %p127, %p128
      %p131 = scmp.ne.s32.totalorder %s116, %s130
      %p132 = scmp.eq.s32.totalorder %s29, 0
      %p133 = por %p131, %p132
      %s135 = sadd.s32 %s134, 1
      %p138 = scmp.eq.s32.totalorder %s23, 1
      %p139 = scmp.ne.s32.totalorder %s134, %s136
      %p140 = scmp.eq.s32.totalorder %s23, 0
      %p141 = por %p139, %p140
      %p142 = scmp.ne.s32.totalorder %s134, %s136
      %p143 = scmp.eq.s32.totalorder %s28, 1
      %p144 = por %p142, %p143
      %p145 = scmp.ne.s32.totalorder %s136, %s137
      %p146 = scmp.eq.s32.totalorder %s28, 0
      %p147 = por %p145, %p146
      %p148 = scmp.ne.s32.totalorder %s136, %s137
      %p149 = scmp.eq.s32.totalorder %s29, 1
      %p150 = por %p148, %p149
      %p152 = scmp.ne.s32.totalorder %s137, %s151
      %p153 = scmp.eq.s32.totalorder %s29, 0
      %p154 = por %p152, %p153
      %s156 = sadd.s32 %s155, 1
      %p159 = scmp.eq.s32.totalorder %s23, 1
      %p160 = scmp.ne.s32.totalorder %s155, %s157
      %p161 = scmp.eq.s32.totalorder %s23, 0
      %p162 = por %p160, %p161
      %p163 = scmp.ne.s32.totalorder %s155, %s157
      %p164 = scmp.eq.s32.totalorder %s28, 1
      %p165 = por %p163, %p164
      %p166 = scmp.ne.s32.totalorder %s157, %s158
      %p167 = scmp.eq.s32.totalorder %s28, 0
      %p168 = por %p166, %p167
      %p169 = scmp.ne.s32.totalorder %s157, %s158
      %p170 = scmp.eq.s32.totalorder %s29, 1
      %p171 = por %p169, %p170
      %p173 = scmp.ne.s32.totalorder %s158, %s172
      %p174 = scmp.eq.s32.totalorder %s29, 0
      %p175 = por %p173, %p174
      %s177 = sadd.s32 %s176, 1
      %p180 = scmp.eq.s32.totalorder %s23, 1
      %p181 = scmp.ne.s32.totalorder %s176, %s178
      %p182 = scmp.eq.s32.totalorder %s23, 0
      %p183 = por %p181, %p182
      %p184 = scmp.ne.s32.totalorder %s176, %s178
      %p185 = scmp.eq.s32.totalorder %s28, 1
      %p186 = por %p184, %p185
      %p187 = scmp.ne.s32.totalorder %s178, %s179
      %p188 = scmp.eq.s32.totalorder %s28, 0
      %p189 = por %p187, %p188
      %p190 = scmp.ne.s32.totalorder %s178, %s179
      %p191 = scmp.eq.s32.totalorder %s29, 1
      %p192 = por %p190, %p191
      %p194 = scmp.ne.s32.totalorder %s179, %s193
      %p195 = scmp.eq.s32.totalorder %s29, 0
      %p196 = por %p194, %p195
      %s198 = sadd.s32 %s197, 1
      %p201 = scmp.eq.s32.totalorder %s23, 1
      %p202 = scmp.ne.s32.totalorder %s197, %s199
      %p203 = scmp.eq.s32.totalorder %s23, 0
      %p204 = por %p202, %p203
      %p205 = scmp.ne.s32.totalorder %s197, %s199
      %p206 = scmp.eq.s32.totalorder %s28, 1
      %p207 = por %p205, %p206
      %p208 = scmp.ne.s32.totalorder %s199, %s200
      %p209 = scmp.eq.s32.totalorder %s28, 0
      %p210 = por %p208, %p209
      %p211 = scmp.ne.s32.totalorder %s199, %s200
      %p212 = scmp.eq.s32.totalorder %s29, 1
      %p213 = por %p211, %p212
      %p215 = scmp.ne.s32.totalorder %s200, %s214
      %p216 = scmp.eq.s32.totalorder %s29, 0
      %p217 = por %p215, %p216
      %s219 = sadd.s32 %s218, 1
      %p222 = scmp.eq.s32.totalorder %s23, 1
      %p223 = scmp.ne.s32.totalorder %s218, %s220
      %p224 = scmp.eq.s32.totalorder %s23, 0
      %p225 = por %p223, %p224
      %p226 = scmp.ne.s32.totalorder %s218, %s220
      %p227 = scmp.eq.s32.totalorder %s28, 1
      %p228 = por %p226, %p227
      %p229 = scmp.ne.s32.totalorder %s220, %s221
      %p230 = scmp.eq.s32.totalorder %s28, 0
      %p231 = por %p229, %p230
      %p232 = scmp.ne.s32.totalorder %s220, %s221
      %p233 = scmp.eq.s32.totalorder %s29, 1
      %p234 = por %p232, %p233
      %p236 = scmp.ne.s32.totalorder %s221, %s235
      %p237 = scmp.eq.s32.totalorder %s29, 0
      %p238 = por %p236, %p237
      %s239 = ssub.s32 %s30, %s42
      %s240 = ssub.s32 %s31, %s38
      %s241 = sor.u32 %s239, %s240
      %p242 = scmp.eq.s32.totalorder %s241, 0
      %s244 = sadd.s32 %s243, 1
      %s245 = scalar_select %p242, %s243, %s244
      %p248 = pneg %p242
      %p249 = scmp.eq.s32.totalorder %s23, 1
      %p250 = por %p248, %p249
      %p251 = scmp.ne.s32.totalorder %s243, %s246
      %p252 = scmp.eq.s32.totalorder %s23, 0
      %p253 = por %p251, %p252
      %p254 = scmp.ne.s32.totalorder %s243, %s246
      %p255 = scmp.eq.s32.totalorder %s28, 1
      %p256 = por %p254, %p255
      %p257 = scmp.ne.s32.totalorder %s246, %s247
      %p258 = scmp.eq.s32.totalorder %s28, 0
      %p259 = por %p257, %p258
      %p260 = scmp.ne.s32.totalorder %s246, %s247
      %p261 = scmp.eq.s32.totalorder %s29, 1
      %p262 = por %p260, %p261
      %p264 = scmp.ne.s32.totalorder %s247, %s263
      %p265 = scmp.eq.s32.totalorder %s29, 0
      %p266 = por %p264, %p265
      %p267 = scmp.le.s32.totalorder 1, %s23
      %p268 = scmp.lt.s32.totalorder %s23, 3
      %p269 = pnand %p267, %p268
      %p270 = pneg %p269
      // Predicated region
      $region9: #{tpu_custom_call.1} parent=5 // pred_check
        _
      $region10: #{tpu_custom_call.1} parent=5 // pred_check_branch
        %272 = sbr.rel (%p269) target = $region12
      $region11: #{tpu_custom_call.1} parent=5 // pred_region
        %s273 = ssub.s32 %s23, 1
        // Predicated region
        $region13: #{tpu_custom_call.1} parent=11 // pred_check
          %p274 = pneg %p84
        $region14: #{tpu_custom_call.1} parent=11 // pred_check_branch
          %276 = sbr.rel (%p274) target = $region16
        $region15: #{tpu_custom_call.1} parent=11 // pred_region
          %s278 = ssub.s32 2048, 2048
          %279 = vsyncadd [#allocation6], %s278
          %s280 = sshll.u32 [#allocation5], 4
          %s281 = int_to_ptr.vmem [resolvable:$true] %s280
          %286 = dma.hbm_to_vmem [thread:$0]  %s1, 2048, %s281, [#allocation6], 64, 64, 4
        $region16: #{tpu_custom_call.1} parent=11 // pred_fallthru
          _
        // Predicated region
        $region17: #{tpu_custom_call.1} parent=11 // pred_check
          %p287 = pneg %p105
        $region18: #{tpu_custom_call.1} parent=11 // pred_check_branch
          %289 = sbr.rel (%p287) target = $region20
        $region19: #{tpu_custom_call.1} parent=11 // pred_region
          _
        $region20: #{tpu_custom_call.1} parent=11 // pred_fallthru
          _
        // Predicated region
        $region21: #{tpu_custom_call.1} parent=11 // pred_check
          %p290 = pneg %p126
        $region22: #{tpu_custom_call.1} parent=11 // pred_check_branch
          %292 = sbr.rel (%p290) target = $region24
        $region23: #{tpu_custom_call.1} parent=11 // pred_region
          %s294 = ssub.s32 3072, 3072
          %295 = vsyncadd [#allocation6], %s294
          %s296 = sshll.u32 [#allocation7], 4
          %s297 = int_to_ptr.vmem [resolvable:$true] %s296
          %302 = dma.hbm_to_vmem [thread:$0]  %s3, 3072, %s297, [#allocation6], 64, 64, 4
        $region24: #{tpu_custom_call.1} parent=11 // pred_fallthru
          _
        // Predicated region
        $region25: #{tpu_custom_call.1} parent=11 // pred_check
          %p303 = pneg %p147
        $region26: #{tpu_custom_call.1} parent=11 // pred_check_branch
          %305 = sbr.rel (%p303) target = $region28
        $region27: #{tpu_custom_call.1} parent=11 // pred_region
          _
        $region28: #{tpu_custom_call.1} parent=11 // pred_fallthru
          _
        // Predicated region
        $region29: #{tpu_custom_call.1} parent=11 // pred_check
          %p306 = pneg %p168
        $region30: #{tpu_custom_call.1} parent=11 // pred_check_branch
          %308 = sbr.rel (%p306) target = $region32
        $region31: #{tpu_custom_call.1} parent=11 // pred_region
          %s310 = ssub.s32 3072, 3072
          %311 = vsyncadd [#allocation9], %s310
          %s312 = sshll.u32 [#allocation8], 4
          %s313 = int_to_ptr.vmem [resolvable:$true] %s312
          %318 = dma.hbm_to_vmem [thread:$0]  %s5, 3072, %s313, [#allocation9], 64, 64, 4
        $region32: #{tpu_custom_call.1} parent=11 // pred_fallthru
          _
        // Predicated region
        $region33: #{tpu_custom_call.1} parent=11 // pred_check
          %p319 = pneg %p189
        $region34: #{tpu_custom_call.1} parent=11 // pred_check_branch
          %321 = sbr.rel (%p319) target = $region36
        $region35: #{tpu_custom_call.1} parent=11 // pred_region
          _
        $region36: #{tpu_custom_call.1} parent=11 // pred_fallthru
          _
        // Predicated region
        $region37: #{tpu_custom_call.1} parent=11 // pred_check
          %p322 = pneg %p210
        $region38: #{tpu_custom_call.1} parent=11 // pred_check_branch
          %324 = sbr.rel (%p322) target = $region40
        $region39: #{tpu_custom_call.1} parent=11 // pred_region
          %s326 = ssub.s32 1024, 1024
          %327 = vsyncadd [#allocation9], %s326
          %s328 = sshll.u32 [#allocation10], 4
          %s329 = int_to_ptr.vmem [resolvable:$true] %s328
          %334 = dma.hbm_to_vmem [thread:$0]  %s7, 1024, %s329, [#allocation9], 64, 64, 4
        $region40: #{tpu_custom_call.1} parent=11 // pred_fallthru
          _
        // Predicated region
        $region41: #{tpu_custom_call.1} parent=11 // pred_check
          %p335 = pneg %p231
        $region42: #{tpu_custom_call.1} parent=11 // pred_check_branch
          %337 = sbr.rel (%p335) target = $region44
        $region43: #{tpu_custom_call.1} parent=11 // pred_region
          _
        $region44: #{tpu_custom_call.1} parent=11 // pred_fallthru
          _
      $region12: #{tpu_custom_call.1} parent=5 // pred_fallthru
        _
      %p338 = scmp.lt.s32.totalorder %s23, 2
      // Predicated region
      $region45: #{tpu_custom_call.1} parent=5 // pred_check
        %p339 = pneg %p338
      $region46: #{tpu_custom_call.1} parent=5 // pred_check_branch
        %341 = sbr.rel (%p339) target = $region48
      $region47: #{tpu_custom_call.1} parent=5 // pred_region
        // Predicated region
        $region49: #{tpu_custom_call.1} parent=47 // pred_check
          %p342 = pneg %p57
        $region50: #{tpu_custom_call.1} parent=47 // pred_check_branch
          %344 = sbr.rel (%p342) target = $region52
        $region51: #{tpu_custom_call.1} parent=47 // pred_region
          %s345 = sand.u32 %s47, 1
          %s346 = scalar_lea.sflag [#allocation3], %s345
          %s347 = sand.u32 %s47, 1
          %s348 = smul.addr %s347, 128
          %s349 = scalar_lea.vmem [#allocation2], %s348
          %s350 = smul.u32 16, %s31
          %s352 = ssub.s32 2048, 2048
          %353 = vsyncadd %s346, %s352
          %s354 = smul.addr %s350, 2
          %s355 = smul.addr %s30, 32
          %s356 = sadd.s32 %s354, %s355
          %s357 = smul.addr %s356, 64
          %s358 = scalar_lea.hbm %s0, %s357
          %s359 = sshll.u32 %s349, 4
          %s360 = int_to_ptr.vmem [resolvable:$true] %s359
          %365 = dma.hbm_to_vmem [thread:$0]  %s358, 2048, %s360, %s346, 128, 128, 8
        $region52: #{tpu_custom_call.1} parent=47 // pred_fallthru
          _
      $region48: #{tpu_custom_call.1} parent=5 // pred_fallthru
        _
      %p366 = scmp.le.s32.totalorder 1, %s23
      %p367 = scmp.lt.s32.totalorder %s23, 3
      %p368 = pnand %p366, %p367
      %p369 = pneg %p368
      // Predicated region
      $region53: #{tpu_custom_call.1} parent=5 // pred_check
        _
      $region54: #{tpu_custom_call.1} parent=5 // pred_check_branch
        %371 = sbr.rel (%p368) target = $region56
      $region55: #{tpu_custom_call.1} parent=5 // pred_region
        %s372 = ssub.s32 %s23, 1
        %s373 = sand.u32 %s50, 1
        %s374 = scalar_lea.sflag [#allocation3], %s373
        %s375 = sand.u32 %s50, 1
        %s376 = smul.addr %s375, 128
        %s377 = scalar_lea.vmem [#allocation2], %s376
        // Predicated region
        $region57: #{tpu_custom_call.1} parent=55 // pred_check
          %p378 = pneg %p63
        $region58: #{tpu_custom_call.1} parent=55 // pred_check_branch
          %380 = sbr.rel (%p378) target = $region60
        $region59: #{tpu_custom_call.1} parent=55 // pred_region
          %381 = dma.done %s374, 2048
        $region60: #{tpu_custom_call.1} parent=55 // pred_fallthru
          _
        // Predicated region
        $region61: #{tpu_custom_call.1} parent=55 // pred_check
          %p382 = pneg %p84
        $region62: #{tpu_custom_call.1} parent=55 // pred_check_branch
          %384 = sbr.rel (%p382) target = $region64
        $region63: #{tpu_custom_call.1} parent=55 // pred_region
          %385 = dma.done [#allocation6], 2048
        $region64: #{tpu_custom_call.1} parent=55 // pred_fallthru
          _
        // Predicated region
        $region65: #{tpu_custom_call.1} parent=55 // pred_check
          %p386 = pneg %p126
        $region66: #{tpu_custom_call.1} parent=55 // pred_check_branch
          %388 = sbr.rel (%p386) target = $region68
        $region67: #{tpu_custom_call.1} parent=55 // pred_region
          %389 = dma.done [#allocation6], 3072
        $region68: #{tpu_custom_call.1} parent=55 // pred_fallthru
          _
        // Predicated region
        $region69: #{tpu_custom_call.1} parent=55 // pred_check
          %p390 = pneg %p168
        $region70: #{tpu_custom_call.1} parent=55 // pred_check_branch
          %392 = sbr.rel (%p390) target = $region72
        $region71: #{tpu_custom_call.1} parent=55 // pred_region
          %393 = dma.done [#allocation9], 3072
        $region72: #{tpu_custom_call.1} parent=55 // pred_fallthru
          _
        // Predicated region
        $region73: #{tpu_custom_call.1} parent=55 // pred_check
          %p394 = pneg %p210
        $region74: #{tpu_custom_call.1} parent=55 // pred_check_branch
          %396 = sbr.rel (%p394) target = $region76
        $region75: #{tpu_custom_call.1} parent=55 // pred_region
          %397 = dma.done [#allocation9], 1024
        $region76: #{tpu_custom_call.1} parent=55 // pred_fallthru
          _
        %s398 = sand.u32 %s50, 1
        %s399 = scalar_lea.sflag [#allocation3], %s398
        %s400 = sand.u32 %s50, 1
        %s401 = smul.addr %s400, 128
        %s402 = scalar_lea.vmem [#allocation2], %s401
        %p403 = pneg %p63
        %p404 = pneg %p60
        %p405 = pneg %p84
        %p406 = pneg %p81
        %p407 = pneg %p105
        %p408 = pneg %p102
        %p409 = pneg %p126
        %p410 = pneg %p123
        %p411 = pneg %p147
        %p412 = pneg %p144
        %p413 = pneg %p168
        %p414 = pneg %p165
        %p415 = pneg %p189
        %p416 = pneg %p186
        %p417 = pneg %p210
        %p418 = pneg %p207
        %p419 = pneg %p231
        %p420 = pneg %p228
        %p421 = pneg %p259
        %p422 = pneg %p256
        %s423 = sand.u32 %s246, 1
        %s424 = scalar_lea.sflag [#allocation4], %s423
        %s425 = sand.u32 %s246, 1
        %s426 = smul.addr %s425, 32
        %s427 = scalar_lea.vmem [#allocation11], %s426
        %s428 = smul.u32 16, %s33
        %v430 = vld [vmem:[%s377] sm:$0xff]
        %v431 = vld [vmem:[%s377 + $0x8] sm:$0xff]
        %v432 = vld [vmem:[%s377 + $0x10] sm:$0xff]
        %v433 = vld [vmem:[%s377 + $0x18] sm:$0xff]
        %v434 = vld [vmem:[%s377 + $0x20] sm:$0xff]
        %v435 = vld [vmem:[%s377 + $0x28] sm:$0xff]
        %v436 = vld [vmem:[%s377 + $0x30] sm:$0xff]
        %v437 = vld [vmem:[%s377 + $0x38] sm:$0xff]
        %v438 = vld [vmem:[%s377 + $0x40] sm:$0xff]
        %v439 = vld [vmem:[%s377 + $0x48] sm:$0xff]
        %v440 = vld [vmem:[%s377 + $0x50] sm:$0xff]
        %v441 = vld [vmem:[%s377 + $0x58] sm:$0xff]
        %v442 = vld [vmem:[%s377 + $0x60] sm:$0xff]
        %v443 = vld [vmem:[%s377 + $0x68] sm:$0xff]
        %v444 = vld [vmem:[%s377 + $0x70] sm:$0xff]
        %v445 = vld [vmem:[%s377 + $0x78] sm:$0xff]
        %v446 = vld [vmem:[#allocation5] sm:$0xf]
        %v447 = vld [vmem:[#allocation5 + $0x4] sm:$0xf]
        %v448 = vld [vmem:[#allocation5 + $0x8] sm:$0xf]
        %v449 = vld [vmem:[#allocation5 + $0xc] sm:$0xf]
        %v450 = vld [vmem:[#allocation5 + $0x10] sm:$0xf]
        %v451 = vld [vmem:[#allocation5 + $0x14] sm:$0xf]
        %v452 = vld [vmem:[#allocation5 + $0x18] sm:$0xf]
        %v453 = vld [vmem:[#allocation5 + $0x1c] sm:$0xf]
        %v454 = vld [vmem:[#allocation5 + $0x20] sm:$0xf]
        %v455 = vld [vmem:[#allocation5 + $0x24] sm:$0xf]
        %v456 = vld [vmem:[#allocation5 + $0x28] sm:$0xf]
        %v457 = vld [vmem:[#allocation5 + $0x2c] sm:$0xf]
        %v458 = vld [vmem:[#allocation5 + $0x30] sm:$0xf]
        %v459 = vld [vmem:[#allocation5 + $0x34] sm:$0xf]
        %v460 = vld [vmem:[#allocation5 + $0x38] sm:$0xf]
        %v461 = vld [vmem:[#allocation5 + $0x3c] sm:$0xf]
        %v462 = vld [vmem:[#allocation5 + $0x40] sm:$0xf]
        %v463 = vld [vmem:[#allocation5 + $0x44] sm:$0xf]
        %v464 = vld [vmem:[#allocation5 + $0x48] sm:$0xf]
        %v465 = vld [vmem:[#allocation5 + $0x4c] sm:$0xf]
        %v466 = vld [vmem:[#allocation5 + $0x50] sm:$0xf]
        %v467 = vld [vmem:[#allocation5 + $0x54] sm:$0xf]
        %v468 = vld [vmem:[#allocation5 + $0x58] sm:$0xf]
        %v469 = vld [vmem:[#allocation5 + $0x5c] sm:$0xf]
        %v470 = vld [vmem:[#allocation5 + $0x60] sm:$0xf]
        %v471 = vld [vmem:[#allocation5 + $0x64] sm:$0xf]
        %v472 = vld [vmem:[#allocation5 + $0x68] sm:$0xf]
        %v473 = vld [vmem:[#allocation5 + $0x6c] sm:$0xf]
        %v474 = vld [vmem:[#allocation5 + $0x70] sm:$0xf]
        %v475 = vld [vmem:[#allocation5 + $0x74] sm:$0xf]
        %v476 = vld [vmem:[#allocation5 + $0x78] sm:$0xf]
        %v477 = vld [vmem:[#allocation5 + $0x7c] sm:$0xf]
        %v478 = vld [vmem:[%s2] sm:$0x1]
        %v480 = vlaneseq
        %v481 = vshrl.u32 %v480, 7
        %v482 = vsub.s32 0, %v481
        %v483 = vrot.slane %v478, %v482
        %v501 = vunpack.c.l.b16 %v430
        %v502 = vunpack.c.h.b16 %v430
        %v503 = vunpack.c.l.b16 %v431
        %v504 = vunpack.c.h.b16 %v431
        %v505 = vunpack.c.l.b16 %v432
        %v506 = vunpack.c.h.b16 %v432
        %v507 = vunpack.c.l.b16 %v433
        %v508 = vunpack.c.h.b16 %v433
        %v509 = vunpack.c.l.b16 %v434
        %v510 = vunpack.c.h.b16 %v434
        %v511 = vunpack.c.l.b16 %v435
        %v512 = vunpack.c.h.b16 %v435
        %v513 = vunpack.c.l.b16 %v436
        %v514 = vunpack.c.h.b16 %v436
        %v515 = vunpack.c.l.b16 %v437
        %v516 = vunpack.c.h.b16 %v437
        %v517 = vunpack.c.l.b16 %v438
        %v518 = vunpack.c.h.b16 %v438
        %v519 = vunpack.c.l.b16 %v439
        %v520 = vunpack.c.h.b16 %v439
        %v521 = vunpack.c.l.b16 %v440
        %v522 = vunpack.c.h.b16 %v440
        %v523 = vunpack.c.l.b16 %v441
        %v524 = vunpack.c.h.b16 %v441
        %v525 = vunpack.c.l.b16 %v442
        %v526 = vunpack.c.h.b16 %v442
        %v527 = vunpack.c.l.b16 %v443
        %v528 = vunpack.c.h.b16 %v443
        %v529 = vunpack.c.l.b16 %v444
        %v530 = vunpack.c.h.b16 %v444
        %v531 = vunpack.c.l.b16 %v445
        %v532 = vunpack.c.h.b16 %v445
        %v533 = vpack.c.b16 %v503, %v501
        %v534 = vpack.c.b16 %v504, %v502
        %v535 = vpack.c.b16 %v507, %v505
        %v536 = vpack.c.b16 %v508, %v506
        %v537 = vpack.c.b16 %v511, %v509
        %v538 = vpack.c.b16 %v512, %v510
        %v539 = vpack.c.b16 %v515, %v513
        %v540 = vpack.c.b16 %v516, %v514
        %v541 = vpack.c.b16 %v519, %v517
        %v542 = vpack.c.b16 %v520, %v518
        %v543 = vpack.c.b16 %v523, %v521
        %v544 = vpack.c.b16 %v524, %v522
        %v545 = vpack.c.b16 %v527, %v525
        %v546 = vpack.c.b16 %v528, %v526
        %v547 = vpack.c.b16 %v531, %v529
        %v548 = vpack.c.b16 %v532, %v530
        %v597 = vunpack.c.l.b16 %v446
        %v598 = vunpack.c.l.b16 %v447
        %v599 = vunpack.c.l.b16 %v448
        %v600 = vunpack.c.l.b16 %v449
        %v601 = vunpack.c.l.b16 %v450
        %v602 = vunpack.c.l.b16 %v451
        %v603 = vunpack.c.l.b16 %v452
        %v604 = vunpack.c.l.b16 %v453
        %v605 = vunpack.c.l.b16 %v454
        %v606 = vunpack.c.l.b16 %v455
        %v607 = vunpack.c.l.b16 %v456
        %v608 = vunpack.c.l.b16 %v457
        %v609 = vunpack.c.l.b16 %v458
        %v610 = vunpack.c.l.b16 %v459
        %v611 = vunpack.c.l.b16 %v460
        %v612 = vunpack.c.l.b16 %v461
        %v613 = vunpack.c.l.b16 %v462
        %v614 = vunpack.c.l.b16 %v463
        %v615 = vunpack.c.l.b16 %v464
        %v616 = vunpack.c.l.b16 %v465
        %v617 = vunpack.c.l.b16 %v466
        %v618 = vunpack.c.l.b16 %v467
        %v619 = vunpack.c.l.b16 %v468
        %v620 = vunpack.c.l.b16 %v469
        %v621 = vunpack.c.l.b16 %v470
        %v622 = vunpack.c.l.b16 %v471
        %v623 = vunpack.c.l.b16 %v472
        %v624 = vunpack.c.l.b16 %v473
        %v625 = vunpack.c.l.b16 %v474
        %v626 = vunpack.c.l.b16 %v475
        %v627 = vunpack.c.l.b16 %v476
        %v628 = vunpack.c.l.b16 %v477
        %v629 = vpack.c.b16 %v598, %v597
        %v630 = vpack.c.b16 %v600, %v599
        %v631 = vpack.c.b16 %v602, %v601
        %v632 = vpack.c.b16 %v604, %v603
        %v633 = vpack.c.b16 %v606, %v605
        %v634 = vpack.c.b16 %v608, %v607
        %v635 = vpack.c.b16 %v610, %v609
        %v636 = vpack.c.b16 %v612, %v611
        %v637 = vpack.c.b16 %v614, %v613
        %v638 = vpack.c.b16 %v616, %v615
        %v639 = vpack.c.b16 %v618, %v617
        %v640 = vpack.c.b16 %v620, %v619
        %v641 = vpack.c.b16 %v622, %v621
        %v642 = vpack.c.b16 %v624, %v623
        %v643 = vpack.c.b16 %v626, %v625
        %v644 = vpack.c.b16 %v628, %v627
        %661 = vmatprep.subr.bf16.mxu0 0
        %662 = vmatpush1.bf16.msra.mxu0 %v629
        %663 = vmatprep.subr.bf16.mxu0 0
        %664 = vmatpush1.bf16.msra.mxu0 %v630
        %665 = vmatprep.subr.bf16.mxu0 0
        %666 = vmatpush1.bf16.msra.mxu0 %v631
        %667 = vmatprep.subr.bf16.mxu0 0
        %668 = vmatpush1.bf16.msra.mxu0 %v632
        %669 = vmatprep.subr.bf16.mxu0 0
        %670 = vmatpush1.bf16.msra.mxu0 %v633
        %671 = vmatprep.subr.bf16.mxu0 0
        %672 = vmatpush1.bf16.msra.mxu0 %v634
        %673 = vmatprep.subr.bf16.mxu0 0
        %674 = vmatpush1.bf16.msra.mxu0 %v635
        %675 = vmatprep.subr.bf16.mxu0 0
        %676 = vmatpush1.bf16.msra.mxu0 %v636
        %677 = vmatprep.subr.bf16.mxu0 0
        %678 = vmatpush1.bf16.msra.mxu0 %v637
        %679 = vmatprep.subr.bf16.mxu0 0
        %680 = vmatpush1.bf16.msra.mxu0 %v638
        %681 = vmatprep.subr.bf16.mxu0 0
        %682 = vmatpush1.bf16.msra.mxu0 %v639
        %683 = vmatprep.subr.bf16.mxu0 0
        %684 = vmatpush1.bf16.msra.mxu0 %v640
        %685 = vmatprep.subr.bf16.mxu0 0
        %686 = vmatpush1.bf16.msra.mxu0 %v641
        %687 = vmatprep.subr.bf16.mxu0 0
        %688 = vmatpush1.bf16.msra.mxu0 %v642
        %689 = vmatprep.subr.bf16.mxu0 0
        %690 = vmatpush1.bf16.msra.mxu0 %v643
        %691 = vmatprep.subr.bf16.mxu0 0
        %692 = vmatpush1.bf16.msra.mxu0 %v644
        %693 = vmatprep.mubr.bf16.mxu0 %v534
        %694 = vmatmul.mubr.bf16.gmra.mrb[0].mxu0 %v533
        %v695 = vpop.f32.mrb[0].mxu0
        %v696 = vadd.f32 %v483, %v695
        %v697 = vpop.f32.mrb[0].mxu0
        %v698 = vpop.f32.mrb[0].mxu0
        %v699 = vadd.f32 %v483, %v698
        %v700 = vpop.f32.mrb[0].mxu0
        %701 = vmatprep.mubr.bf16.mxu0 %v536
        %702 = vmatmul.mubr.bf16.gmra.mrb[0].mxu0 %v535
        %v703 = vpop.f32.mrb[0].mxu0
        %v704 = vadd.f32 %v483, %v703
        %v705 = vpop.f32.mrb[0].mxu0
        %v706 = vpop.f32.mrb[0].mxu0
        %v707 = vadd.f32 %v483, %v706
        %v708 = vpop.f32.mrb[0].mxu0
        %709 = vmatprep.mubr.bf16.mxu0 %v538
        %710 = vmatmul.mubr.bf16.gmra.mrb[0].mxu0 %v537
        %v711 = vpop.f32.mrb[0].mxu0
        %v712 = vadd.f32 %v483, %v711
        %v713 = vpop.f32.mrb[0].mxu0
        %v714 = vpop.f32.mrb[0].mxu0
        %v715 = vadd.f32 %v483, %v714
        %v716 = vpop.f32.mrb[0].mxu0
        %717 = vmatprep.mubr.bf16.mxu0 %v540
        %718 = vmatmul.mubr.bf16.gmra.mrb[0].mxu0 %v539
        %v719 = vpop.f32.mrb[0].mxu0
        %v720 = vadd.f32 %v483, %v719
        %v721 = vpop.f32.mrb[0].mxu0
        %v722 = vpop.f32.mrb[0].mxu0
        %v723 = vadd.f32 %v483, %v722
        %v724 = vpop.f32.mrb[0].mxu0
        %725 = vmatprep.mubr.bf16.mxu0 %v542
        %726 = vmatmul.mubr.bf16.gmra.mrb[0].mxu0 %v541
        %v727 = vpop.f32.mrb[0].mxu0
        %v728 = vadd.f32 %v483, %v727
        %v729 = vpop.f32.mrb[0].mxu0
        %v730 = vpop.f32.mrb[0].mxu0
        %v731 = vadd.f32 %v483, %v730
        %v732 = vpop.f32.mrb[0].mxu0
        %733 = vmatprep.mubr.bf16.mxu0 %v544
        %734 = vmatmul.mubr.bf16.gmra.mrb[0].mxu0 %v543
        %v735 = vpop.f32.mrb[0].mxu0
        %v736 = vadd.f32 %v483, %v735
        %v737 = vpop.f32.mrb[0].mxu0
        %v738 = vpop.f32.mrb[0].mxu0
        %v739 = vadd.f32 %v483, %v738
        %v740 = vpop.f32.mrb[0].mxu0
        %741 = vmatprep.mubr.bf16.mxu0 %v546
        %742 = vmatmul.mubr.bf16.gmra.mrb[0].mxu0 %v545
        %v743 = vpop.f32.mrb[0].mxu0
        %v744 = vadd.f32 %v483, %v743
        %v745 = vpop.f32.mrb[0].mxu0
        %v746 = vpop.f32.mrb[0].mxu0
        %v747 = vadd.f32 %v483, %v746
        %v748 = vpop.f32.mrb[0].mxu0
        %749 = vmatprep.mubr.bf16.mxu0 %v548
        %750 = vmatmul.mubr.bf16.gmra.mrb[0].mxu0 %v547
        %v751 = vpop.f32.mrb[0].mxu0
        %v752 = vadd.f32 %v483, %v751
        %v753 = vpop.f32.mrb[0].mxu0
        %v754 = vpop.f32.mrb[0].mxu0
        %v755 = vadd.f32 %v483, %v754
        %v756 = vpop.f32.mrb[0].mxu0
        %757 = vdwg.mxu0
        %v758 = vmax.f32 %v696, 0.0
        %v759 = vmax.f32 %v699, 0.0
        %v760 = vmax.f32 %v704, 0.0
        %v761 = vmax.f32 %v707, 0.0
        %v762 = vmax.f32 %v712, 0.0
        %v763 = vmax.f32 %v715, 0.0
        %v764 = vmax.f32 %v720, 0.0
        %v765 = vmax.f32 %v723, 0.0
        %v766 = vmax.f32 %v728, 0.0
        %v767 = vmax.f32 %v731, 0.0
        %v768 = vmax.f32 %v736, 0.0
        %v769 = vmax.f32 %v739, 0.0
        %v770 = vmax.f32 %v744, 0.0
        %v771 = vmax.f32 %v747, 0.0
        %v772 = vmax.f32 %v752, 0.0
        %v773 = vmax.f32 %v755, 0.0
        %v774 = vpack.c.bf16 %v759, %v758
        %v775 = vpack.c.bf16 %v761, %v760
        %v776 = vpack.c.bf16 %v763, %v762
        %v777 = vpack.c.bf16 %v765, %v764
        %v778 = vpack.c.bf16 %v767, %v766
        %v779 = vpack.c.bf16 %v769, %v768
        %v780 = vpack.c.bf16 %v771, %v770
        %v781 = vpack.c.bf16 %v773, %v772
        %v782 = vld [vmem:[#allocation7] sm:$0xf]
        %v783 = vld [vmem:[#allocation7 + $0x4] sm:$0xf]
        %v784 = vld [vmem:[#allocation7 + $0x8] sm:$0xf]
        %v785 = vld [vmem:[#allocation7 + $0xc] sm:$0xf]
        %v786 = vld [vmem:[#allocation7 + $0x10] sm:$0xf]
        %v787 = vld [vmem:[#allocation7 + $0x14] sm:$0xf]
        %v788 = vld [vmem:[#allocation7 + $0x18] sm:$0xf]
        %v789 = vld [vmem:[#allocation7 + $0x1c] sm:$0xf]
        %v790 = vld [vmem:[#allocation7 + $0x20] sm:$0xf]
        %v791 = vld [vmem:[#allocation7 + $0x24] sm:$0xf]
        %v792 = vld [vmem:[#allocation7 + $0x28] sm:$0xf]
        %v793 = vld [vmem:[#allocation7 + $0x2c] sm:$0xf]
        %v794 = vld [vmem:[#allocation7 + $0x30] sm:$0xf]
        %v795 = vld [vmem:[#allocation7 + $0x34] sm:$0xf]
        %v796 = vld [vmem:[#allocation7 + $0x38] sm:$0xf]
        %v797 = vld [vmem:[#allocation7 + $0x3c] sm:$0xf]
        %v798 = vld [vmem:[%s4] sm:$0x1]
        %v800 = vlaneseq
        %v801 = vshrl.u32 %v800, 7
        %v802 = vsub.s32 0, %v801
        %v803 = vrot.slane %v798, %v802
        %v821 = vunpack.c.l.b16 %v782
        %v822 = vunpack.c.l.b16 %v783
        %v823 = vunpack.c.l.b16 %v784
        %v824 = vunpack.c.l.b16 %v785
        %v825 = vunpack.c.l.b16 %v786
        %v826 = vunpack.c.l.b16 %v787
        %v827 = vunpack.c.l.b16 %v788
        %v828 = vunpack.c.l.b16 %v789
        %v829 = vunpack.c.l.b16 %v790
        %v830 = vunpack.c.l.b16 %v791
        %v831 = vunpack.c.l.b16 %v792
        %v832 = vunpack.c.l.b16 %v793
        %v833 = vunpack.c.l.b16 %v794
        %v834 = vunpack.c.l.b16 %v795
        %v835 = vunpack.c.l.b16 %v796
        %v836 = vunpack.c.l.b16 %v797
        %v837 = vpack.c.b16 %v822, %v821
        %v838 = vpack.c.b16 %v824, %v823
        %v839 = vpack.c.b16 %v826, %v825
        %v840 = vpack.c.b16 %v828, %v827
        %v841 = vpack.c.b16 %v830, %v829
        %v842 = vpack.c.b16 %v832, %v831
        %v843 = vpack.c.b16 %v834, %v833
        %v844 = vpack.c.b16 %v836, %v835
        %853 = vmatprep.subr.bf16.mxu0 0
        %854 = vmatpush1.bf16.msra.mxu0 %v837
        %855 = vmatprep.subr.bf16.mxu0 0
        %856 = vmatpush1.bf16.msra.mxu0 %v838
        %857 = vmatprep.subr.bf16.mxu0 0
        %858 = vmatpush1.bf16.msra.mxu0 %v839
        %859 = vmatprep.subr.bf16.mxu0 0
        %860 = vmatpush1.bf16.msra.mxu0 %v840
        %861 = vmatprep.subr.bf16.mxu0 0
        %862 = vmatpush1.bf16.msra.mxu0 %v841
        %863 = vmatprep.subr.bf16.mxu0 0
        %864 = vmatpush1.bf16.msra.mxu0 %v842
        %865 = vmatprep.subr.bf16.mxu0 0
        %866 = vmatpush1.bf16.msra.mxu0 %v843
        %867 = vmatprep.subr.bf16.mxu0 0
        %868 = vmatpush1.bf16.msra.mxu0 %v844
        %869 = vmatprep.subr.bf16.mxu0 0
        %870 = vmatpush1.bf16.msra.mxu0 0
        %871 = vmatprep.subr.bf16.mxu0 0
        %872 = vmatpush1.bf16.msra.mxu0 0
        %873 = vmatprep.subr.bf16.mxu0 0
        %874 = vmatpush1.bf16.msra.mxu0 0
        %875 = vmatprep.subr.bf16.mxu0 0
        %876 = vmatpush1.bf16.msra.mxu0 0
        %877 = vmatprep.subr.bf16.mxu0 0
        %878 = vmatpush1.bf16.msra.mxu0 0
        %879 = vmatprep.subr.bf16.mxu0 0
        %880 = vmatpush1.bf16.msra.mxu0 0
        %881 = vmatprep.subr.bf16.mxu0 0
        %882 = vmatpush1.bf16.msra.mxu0 0
        %883 = vmatprep.subr.bf16.mxu0 0
        %884 = vmatpush1.bf16.msra.mxu0 0
        %885 = vmatprep.mubr.bf16.mxu0 0
        %886 = vmatmul.mubr.bf16.gmra.mrb[0].mxu0 %v774
        %v887 = vpop.f32.mrb[0].mxu0
        %v888 = vadd.f32 %v803, %v887
        %v889 = vpop.f32.mrb[0].mxu0
        %v890 = vpop.f32.mrb[0].mxu0
        %v891 = vadd.f32 %v803, %v890
        %v892 = vpop.f32.mrb[0].mxu0
        %893 = vmatprep.mubr.bf16.mxu0 0
        %894 = vmatmul.mubr.bf16.gmra.mrb[0].mxu0 %v775
        %v895 = vpop.f32.mrb[0].mxu0
        %v896 = vadd.f32 %v803, %v895
        %v897 = vpop.f32.mrb[0].mxu0
        %v898 = vpop.f32.mrb[0].mxu0
        %v899 = vadd.f32 %v803, %v898
        %v900 = vpop.f32.mrb[0].mxu0
        %901 = vmatprep.mubr.bf16.mxu0 0
        %902 = vmatmul.mubr.bf16.gmra.mrb[0].mxu0 %v776
        %v903 = vpop.f32.mrb[0].mxu0
        %v904 = vadd.f32 %v803, %v903
        %v905 = vpop.f32.mrb[0].mxu0
        %v906 = vpop.f32.mrb[0].mxu0
        %v907 = vadd.f32 %v803, %v906
        %v908 = vpop.f32.mrb[0].mxu0
        %909 = vmatprep.mubr.bf16.mxu0 0
        %910 = vmatmul.mubr.bf16.gmra.mrb[0].mxu0 %v777
        %v911 = vpop.f32.mrb[0].mxu0
        %v912 = vadd.f32 %v803, %v911
        %v913 = vpop.f32.mrb[0].mxu0
        %v914 = vpop.f32.mrb[0].mxu0
        %v915 = vadd.f32 %v803, %v914
        %v916 = vpop.f32.mrb[0].mxu0
        %917 = vmatprep.mubr.bf16.mxu0 0
        %918 = vmatmul.mubr.bf16.gmra.mrb[0].mxu0 %v778
        %v919 = vpop.f32.mrb[0].mxu0
        %v920 = vadd.f32 %v803, %v919
        %v921 = vpop.f32.mrb[0].mxu0
        %v922 = vpop.f32.mrb[0].mxu0
        %v923 = vadd.f32 %v803, %v922
        %v924 = vpop.f32.mrb[0].mxu0
        %925 = vmatprep.mubr.bf16.mxu0 0
        %926 = vmatmul.mubr.bf16.gmra.mrb[0].mxu0 %v779
        %v927 = vpop.f32.mrb[0].mxu0
        %v928 = vadd.f32 %v803, %v927
        %v929 = vpop.f32.mrb[0].mxu0
        %v930 = vpop.f32.mrb[0].mxu0
        %v931 = vadd.f32 %v803, %v930
        %v932 = vpop.f32.mrb[0].mxu0
        %933 = vmatprep.mubr.bf16.mxu0 0
        %934 = vmatmul.mubr.bf16.gmra.mrb[0].mxu0 %v780
        %v935 = vpop.f32.mrb[0].mxu0
        %v936 = vadd.f32 %v803, %v935
        %v937 = vpop.f32.mrb[0].mxu0
        %v938 = vpop.f32.mrb[0].mxu0
        %v939 = vadd.f32 %v803, %v938
        %v940 = vpop.f32.mrb[0].mxu0
        %941 = vmatprep.mubr.bf16.mxu0 0
        %942 = vmatmul.mubr.bf16.gmra.mrb[0].mxu0 %v781
        %v943 = vpop.f32.mrb[0].mxu0
        %v944 = vadd.f32 %v803, %v943
        %v945 = vpop.f32.mrb[0].mxu0
        %v946 = vpop.f32.mrb[0].mxu0
        %v947 = vadd.f32 %v803, %v946
        %v948 = vpop.f32.mrb[0].mxu0
        %949 = vdwg.mxu0
        %v950 = vmax.f32 %v888, 0.0
        %v951 = vmax.f32 %v891, 0.0
        %v952 = vmax.f32 %v896, 0.0
        %v953 = vmax.f32 %v899, 0.0
        %v954 = vmax.f32 %v904, 0.0
        %v955 = vmax.f32 %v907, 0.0
        %v956 = vmax.f32 %v912, 0.0
        %v957 = vmax.f32 %v915, 0.0
        %v958 = vmax.f32 %v920, 0.0
        %v959 = vmax.f32 %v923, 0.0
        %v960 = vmax.f32 %v928, 0.0
        %v961 = vmax.f32 %v931, 0.0
        %v962 = vmax.f32 %v936, 0.0
        %v963 = vmax.f32 %v939, 0.0
        %v964 = vmax.f32 %v944, 0.0
        %v965 = vmax.f32 %v947, 0.0
        %v966 = vpack.c.bf16 %v951, %v950
        %v967 = vpack.c.bf16 %v953, %v952
        %v968 = vpack.c.bf16 %v955, %v954
        %v969 = vpack.c.bf16 %v957, %v956
        %v970 = vpack.c.bf16 %v959, %v958
        %v971 = vpack.c.bf16 %v961, %v960
        %v972 = vpack.c.bf16 %v963, %v962
        %v973 = vpack.c.bf16 %v965, %v964
        %v974 = vld [vmem:[#allocation8] sm:$0xf]
        %v975 = vld [vmem:[#allocation8 + $0x4] sm:$0xf]
        %v976 = vld [vmem:[#allocation8 + $0x8] sm:$0xf]
        %v977 = vld [vmem:[#allocation8 + $0xc] sm:$0xf]
        %v978 = vld [vmem:[#allocation8 + $0x10] sm:$0xf]
        %v979 = vld [vmem:[#allocation8 + $0x14] sm:$0xf]
        %v980 = vld [vmem:[#allocation8 + $0x18] sm:$0xf]
        %v981 = vld [vmem:[#allocation8 + $0x1c] sm:$0xf]
        %v982 = vld [vmem:[#allocation8 + $0x20] sm:$0xf]
        %v983 = vld [vmem:[#allocation8 + $0x24] sm:$0xf]
        %v984 = vld [vmem:[#allocation8 + $0x28] sm:$0xf]
        %v985 = vld [vmem:[#allocation8 + $0x2c] sm:$0xf]
        %v986 = vld [vmem:[#allocation8 + $0x30] sm:$0xf]
        %v987 = vld [vmem:[#allocation8 + $0x34] sm:$0xf]
        %v988 = vld [vmem:[#allocation8 + $0x38] sm:$0xf]
        %v989 = vld [vmem:[#allocation8 + $0x3c] sm:$0xf]
        %v1006 = vunpack.c.l.b16 %v974
        %v1007 = vunpack.c.l.b16 %v975
        %v1008 = vunpack.c.l.b16 %v976
        %v1009 = vunpack.c.l.b16 %v977
        %v1010 = vunpack.c.l.b16 %v978
        %v1011 = vunpack.c.l.b16 %v979
        %v1012 = vunpack.c.l.b16 %v980
        %v1013 = vunpack.c.l.b16 %v981
        %v1014 = vunpack.c.l.b16 %v982
        %v1015 = vunpack.c.l.b16 %v983
        %v1016 = vunpack.c.l.b16 %v984
        %v1017 = vunpack.c.l.b16 %v985
        %v1018 = vunpack.c.l.b16 %v986
        %v1019 = vunpack.c.l.b16 %v987
        %v1020 = vunpack.c.l.b16 %v988
        %v1021 = vunpack.c.l.b16 %v989
        %v1022 = vpack.c.b16 %v1007, %v1006
        %v1023 = vpack.c.b16 %v1009, %v1008
        %v1024 = vpack.c.b16 %v1011, %v1010
        %v1025 = vpack.c.b16 %v1013, %v1012
        %v1026 = vpack.c.b16 %v1015, %v1014
        %v1027 = vpack.c.b16 %v1017, %v1016
        %v1028 = vpack.c.b16 %v1019, %v1018
        %v1029 = vpack.c.b16 %v1021, %v1020
        %1038 = vmatprep.subr.bf16.mxu0 0
        %1039 = vmatpush1.bf16.msra.mxu0 %v1022
        %1040 = vmatprep.subr.bf16.mxu0 0
        %1041 = vmatpush1.bf16.msra.mxu0 %v1023
        %1042 = vmatprep.subr.bf16.mxu0 0
        %1043 = vmatpush1.bf16.msra.mxu0 %v1024
        %1044 = vmatprep.subr.bf16.mxu0 0
        %1045 = vmatpush1.bf16.msra.mxu0 %v1025
        %1046 = vmatprep.subr.bf16.mxu0 0
        %1047 = vmatpush1.bf16.msra.mxu0 %v1026
        %1048 = vmatprep.subr.bf16.mxu0 0
        %1049 = vmatpush1.bf16.msra.mxu0 %v1027
        %1050 = vmatprep.subr.bf16.mxu0 0
        %1051 = vmatpush1.bf16.msra.mxu0 %v1028
        %1052 = vmatprep.subr.bf16.mxu0 0
        %1053 = vmatpush1.bf16.msra.mxu0 %v1029
        %1054 = vmatprep.subr.bf16.mxu0 0
        %1055 = vmatpush1.bf16.msra.mxu0 0
        %1056 = vmatprep.subr.bf16.mxu0 0
        %1057 = vmatpush1.bf16.msra.mxu0 0
        %1058 = vmatprep.subr.bf16.mxu0 0
        %1059 = vmatpush1.bf16.msra.mxu0 0
        %1060 = vmatprep.subr.bf16.mxu0 0
        %1061 = vmatpush1.bf16.msra.mxu0 0
        %1062 = vmatprep.subr.bf16.mxu0 0
        %1063 = vmatpush1.bf16.msra.mxu0 0
        %1064 = vmatprep.subr.bf16.mxu0 0
        %1065 = vmatpush1.bf16.msra.mxu0 0
        %1066 = vmatprep.subr.bf16.mxu0 0
        %1067 = vmatpush1.bf16.msra.mxu0 0
        %1068 = vmatprep.subr.bf16.mxu0 0
        %1069 = vmatpush1.bf16.msra.mxu0 0
        %1070 = vmatprep.mubr.bf16.mxu0 0
        %1071 = vmatmul.mubr.bf16.gmra.mrb[0].mxu0 %v966
        %v1072 = vpop.f32.mrb[0].mxu0
        %v1073 = vadd.f32 0.0, %v1072
        %v1074 = vpop.f32.mrb[0].mxu0
        %v1075 = vpop.f32.mrb[0].mxu0
        %v1076 = vadd.f32 0.0, %v1075
        %v1077 = vpop.f32.mrb[0].mxu0
        %1078 = vmatprep.mubr.bf16.mxu0 0
        %1079 = vmatmul.mubr.bf16.gmra.mrb[0].mxu0 %v967
        %v1080 = vpop.f32.mrb[0].mxu0
        %v1081 = vadd.f32 0.0, %v1080
        %v1082 = vpop.f32.mrb[0].mxu0
        %v1083 = vpop.f32.mrb[0].mxu0
        %v1084 = vadd.f32 0.0, %v1083
        %v1085 = vpop.f32.mrb[0].mxu0
        %1086 = vmatprep.mubr.bf16.mxu0 0
        %1087 = vmatmul.mubr.bf16.gmra.mrb[0].mxu0 %v968
        %v1088 = vpop.f32.mrb[0].mxu0
        %v1089 = vadd.f32 0.0, %v1088
        %v1090 = vpop.f32.mrb[0].mxu0
        %v1091 = vpop.f32.mrb[0].mxu0
        %v1092 = vadd.f32 0.0, %v1091
        %v1093 = vpop.f32.mrb[0].mxu0
        %1094 = vmatprep.mubr.bf16.mxu0 0
        %1095 = vmatmul.mubr.bf16.gmra.mrb[0].mxu0 %v969
        %v1096 = vpop.f32.mrb[0].mxu0
        %v1097 = vadd.f32 0.0, %v1096
        %v1098 = vpop.f32.mrb[0].mxu0
        %v1099 = vpop.f32.mrb[0].mxu0
        %v1100 = vadd.f32 0.0, %v1099
        %v1101 = vpop.f32.mrb[0].mxu0
        %1102 = vmatprep.mubr.bf16.mxu0 0
        %1103 = vmatmul.mubr.bf16.gmra.mrb[0].mxu0 %v970
        %v1104 = vpop.f32.mrb[0].mxu0
        %v1105 = vadd.f32 0.0, %v1104
        %v1106 = vpop.f32.mrb[0].mxu0
        %v1107 = vpop.f32.mrb[0].mxu0
        %v1108 = vadd.f32 0.0, %v1107
        %v1109 = vpop.f32.mrb[0].mxu0
        %1110 = vmatprep.mubr.bf16.mxu0 0
        %1111 = vmatmul.mubr.bf16.gmra.mrb[0].mxu0 %v971
        %v1112 = vpop.f32.mrb[0].mxu0
        %v1113 = vadd.f32 0.0, %v1112
        %v1114 = vpop.f32.mrb[0].mxu0
        %v1115 = vpop.f32.mrb[0].mxu0
        %v1116 = vadd.f32 0.0, %v1115
        %v1117 = vpop.f32.mrb[0].mxu0
        %1118 = vmatprep.mubr.bf16.mxu0 0
        %1119 = vmatmul.mubr.bf16.gmra.mrb[0].mxu0 %v972
        %v1120 = vpop.f32.mrb[0].mxu0
        %v1121 = vadd.f32 0.0, %v1120
        %v1122 = vpop.f32.mrb[0].mxu0
        %v1123 = vpop.f32.mrb[0].mxu0
        %v1124 = vadd.f32 0.0, %v1123
        %v1125 = vpop.f32.mrb[0].mxu0
        %1126 = vmatprep.mubr.bf16.mxu0 0
        %1127 = vmatmul.mubr.bf16.gmra.mrb[0].mxu0 %v973
        %v1128 = vpop.f32.mrb[0].mxu0
        %v1129 = vadd.f32 0.0, %v1128
        %v1130 = vpop.f32.mrb[0].mxu0
        %v1131 = vpop.f32.mrb[0].mxu0
        %v1132 = vadd.f32 0.0, %v1131
        %v1133 = vpop.f32.mrb[0].mxu0
        %1134 = vdwg.mxu0
        %v1135 = vadd.f32 %v758, %v1073
        %v1136 = vadd.f32 %v759, %v1076
        %v1137 = vadd.f32 %v760, %v1081
        %v1138 = vadd.f32 %v761, %v1084
        %v1139 = vadd.f32 %v762, %v1089
        %v1140 = vadd.f32 %v763, %v1092
        %v1141 = vadd.f32 %v764, %v1097
        %v1142 = vadd.f32 %v765, %v1100
        %v1143 = vadd.f32 %v766, %v1105
        %v1144 = vadd.f32 %v767, %v1108
        %v1145 = vadd.f32 %v768, %v1113
        %v1146 = vadd.f32 %v769, %v1116
        %v1147 = vadd.f32 %v770, %v1121
        %v1148 = vadd.f32 %v771, %v1124
        %v1149 = vadd.f32 %v772, %v1129
        %v1150 = vadd.f32 %v773, %v1132
        %v1151 = vld [vmem:[%s6] sm:$0x1]
        %v1153 = vlaneseq
        %v1154 = vshrl.u32 %v1153, 7
        %v1155 = vsub.s32 0, %v1154
        %v1156 = vrot.slane %v1151, %v1155
        %v1158 = vadd.f32 %v1135, %v1156
        %v1159 = vadd.f32 %v1136, %v1156
        %v1160 = vadd.f32 %v1137, %v1156
        %v1161 = vadd.f32 %v1138, %v1156
        %v1162 = vadd.f32 %v1139, %v1156
        %v1163 = vadd.f32 %v1140, %v1156
        %v1164 = vadd.f32 %v1141, %v1156
        %v1165 = vadd.f32 %v1142, %v1156
        %v1166 = vadd.f32 %v1143, %v1156
        %v1167 = vadd.f32 %v1144, %v1156
        %v1168 = vadd.f32 %v1145, %v1156
        %v1169 = vadd.f32 %v1146, %v1156
        %v1170 = vadd.f32 %v1147, %v1156
        %v1171 = vadd.f32 %v1148, %v1156
        %v1172 = vadd.f32 %v1149, %v1156
        %v1173 = vadd.f32 %v1150, %v1156
        %v1174 = vpack.c.bf16 %v1159, %v1158
        %v1175 = vpack.c.bf16 %v1161, %v1160
        %v1176 = vpack.c.bf16 %v1163, %v1162
        %v1177 = vpack.c.bf16 %v1165, %v1164
        %v1178 = vpack.c.bf16 %v1167, %v1166
        %v1179 = vpack.c.bf16 %v1169, %v1168
        %v1180 = vpack.c.bf16 %v1171, %v1170
        %v1181 = vpack.c.bf16 %v1173, %v1172
        %s1182 = scalar_lea.vmem [#allocation7], 64
        %v1183 = vld [vmem:[%s1182] sm:$0xf]
        %v1184 = vld [vmem:[%s1182 + $0x4] sm:$0xf]
        %v1185 = vld [vmem:[%s1182 + $0x8] sm:$0xf]
        %v1186 = vld [vmem:[%s1182 + $0xc] sm:$0xf]
        %v1187 = vld [vmem:[%s1182 + $0x10] sm:$0xf]
        %v1188 = vld [vmem:[%s1182 + $0x14] sm:$0xf]
        %v1189 = vld [vmem:[%s1182 + $0x18] sm:$0xf]
        %v1190 = vld [vmem:[%s1182 + $0x1c] sm:$0xf]
        %v1191 = vld [vmem:[%s1182 + $0x20] sm:$0xf]
        %v1192 = vld [vmem:[%s1182 + $0x24] sm:$0xf]
        %v1193 = vld [vmem:[%s1182 + $0x28] sm:$0xf]
        %v1194 = vld [vmem:[%s1182 + $0x2c] sm:$0xf]
        %v1195 = vld [vmem:[%s1182 + $0x30] sm:$0xf]
        %v1196 = vld [vmem:[%s1182 + $0x34] sm:$0xf]
        %v1197 = vld [vmem:[%s1182 + $0x38] sm:$0xf]
        %v1198 = vld [vmem:[%s1182 + $0x3c] sm:$0xf]
        %s1199 = scalar_lea.vmem %s4, 1
        %v1200 = vld [vmem:[%s1199] sm:$0x1]
        %v1202 = vlaneseq
        %v1203 = vshrl.u32 %v1202, 7
        %v1204 = vsub.s32 0, %v1203
        %v1205 = vrot.slane %v1200, %v1204
        %v1223 = vunpack.c.l.b16 %v1183
        %v1224 = vunpack.c.l.b16 %v1184
        %v1225 = vunpack.c.l.b16 %v1185
        %v1226 = vunpack.c.l.b16 %v1186
        %v1227 = vunpack.c.l.b16 %v1187
        %v1228 = vunpack.c.l.b16 %v1188
        %v1229 = vunpack.c.l.b16 %v1189
        %v1230 = vunpack.c.l.b16 %v1190
        %v1231 = vunpack.c.l.b16 %v1191
        %v1232 = vunpack.c.l.b16 %v1192
        %v1233 = vunpack.c.l.b16 %v1193
        %v1234 = vunpack.c.l.b16 %v1194
        %v1235 = vunpack.c.l.b16 %v1195
        %v1236 = vunpack.c.l.b16 %v1196
        %v1237 = vunpack.c.l.b16 %v1197
        %v1238 = vunpack.c.l.b16 %v1198
        %v1239 = vpack.c.b16 %v1224, %v1223
        %v1240 = vpack.c.b16 %v1226, %v1225
        %v1241 = vpack.c.b16 %v1228, %v1227
        %v1242 = vpack.c.b16 %v1230, %v1229
        %v1243 = vpack.c.b16 %v1232, %v1231
        %v1244 = vpack.c.b16 %v1234, %v1233
        %v1245 = vpack.c.b16 %v1236, %v1235
        %v1246 = vpack.c.b16 %v1238, %v1237
        %1255 = vmatprep.subr.bf16.mxu0 0
        %1256 = vmatpush1.bf16.msra.mxu0 %v1239
        %1257 = vmatprep.subr.bf16.mxu0 0
        %1258 = vmatpush1.bf16.msra.mxu0 %v1240
        %1259 = vmatprep.subr.bf16.mxu0 0
        %1260 = vmatpush1.bf16.msra.mxu0 %v1241
        %1261 = vmatprep.subr.bf16.mxu0 0
        %1262 = vmatpush1.bf16.msra.mxu0 %v1242
        %1263 = vmatprep.subr.bf16.mxu0 0
        %1264 = vmatpush1.bf16.msra.mxu0 %v1243
        %1265 = vmatprep.subr.bf16.mxu0 0
        %1266 = vmatpush1.bf16.msra.mxu0 %v1244
        %1267 = vmatprep.subr.bf16.mxu0 0
        %1268 = vmatpush1.bf16.msra.mxu0 %v1245
        %1269 = vmatprep.subr.bf16.mxu0 0
        %1270 = vmatpush1.bf16.msra.mxu0 %v1246
        %1271 = vmatprep.subr.bf16.mxu0 0
        %1272 = vmatpush1.bf16.msra.mxu0 0
        %1273 = vmatprep.subr.bf16.mxu0 0
        %1274 = vmatpush1.bf16.msra.mxu0 0
        %1275 = vmatprep.subr.bf16.mxu0 0
        %1276 = vmatpush1.bf16.msra.mxu0 0
        %1277 = vmatprep.subr.bf16.mxu0 0
        %1278 = vmatpush1.bf16.msra.mxu0 0
        %1279 = vmatprep.subr.bf16.mxu0 0
        %1280 = vmatpush1.bf16.msra.mxu0 0
        %1281 = vmatprep.subr.bf16.mxu0 0
        %1282 = vmatpush1.bf16.msra.mxu0 0
        %1283 = vmatprep.subr.bf16.mxu0 0
        %1284 = vmatpush1.bf16.msra.mxu0 0
        %1285 = vmatprep.subr.bf16.mxu0 0
        %1286 = vmatpush1.bf16.msra.mxu0 0
        %1287 = vmatprep.mubr.bf16.mxu0 0
        %1288 = vmatmul.mubr.bf16.gmra.mrb[0].mxu0 %v1174
        %v1289 = vpop.f32.mrb[0].mxu0
        %v1290 = vadd.f32 %v1205, %v1289
        %v1291 = vpop.f32.mrb[0].mxu0
        %v1292 = vpop.f32.mrb[0].mxu0
        %v1293 = vadd.f32 %v1205, %v1292
        %v1294 = vpop.f32.mrb[0].mxu0
        %1295 = vmatprep.mubr.bf16.mxu0 0
        %1296 = vmatmul.mubr.bf16.gmra.mrb[0].mxu0 %v1175
        %v1297 = vpop.f32.mrb[0].mxu0
        %v1298 = vadd.f32 %v1205, %v1297
        %v1299 = vpop.f32.mrb[0].mxu0
        %v1300 = vpop.f32.mrb[0].mxu0
        %v1301 = vadd.f32 %v1205, %v1300
        %v1302 = vpop.f32.mrb[0].mxu0
        %1303 = vmatprep.mubr.bf16.mxu0 0
        %1304 = vmatmul.mubr.bf16.gmra.mrb[0].mxu0 %v1176
        %v1305 = vpop.f32.mrb[0].mxu0
        %v1306 = vadd.f32 %v1205, %v1305
        %v1307 = vpop.f32.mrb[0].mxu0
        %v1308 = vpop.f32.mrb[0].mxu0
        %v1309 = vadd.f32 %v1205, %v1308
        %v1310 = vpop.f32.mrb[0].mxu0
        %1311 = vmatprep.mubr.bf16.mxu0 0
        %1312 = vmatmul.mubr.bf16.gmra.mrb[0].mxu0 %v1177
        %v1313 = vpop.f32.mrb[0].mxu0
        %v1314 = vadd.f32 %v1205, %v1313
        %v1315 = vpop.f32.mrb[0].mxu0
        %v1316 = vpop.f32.mrb[0].mxu0
        %v1317 = vadd.f32 %v1205, %v1316
        %v1318 = vpop.f32.mrb[0].mxu0
        %1319 = vmatprep.mubr.bf16.mxu0 0
        %1320 = vmatmul.mubr.bf16.gmra.mrb[0].mxu0 %v1178
        %v1321 = vpop.f32.mrb[0].mxu0
        %v1322 = vadd.f32 %v1205, %v1321
        %v1323 = vpop.f32.mrb[0].mxu0
        %v1324 = vpop.f32.mrb[0].mxu0
        %v1325 = vadd.f32 %v1205, %v1324
        %v1326 = vpop.f32.mrb[0].mxu0
        %1327 = vmatprep.mubr.bf16.mxu0 0
        %1328 = vmatmul.mubr.bf16.gmra.mrb[0].mxu0 %v1179
        %v1329 = vpop.f32.mrb[0].mxu0
        %v1330 = vadd.f32 %v1205, %v1329
        %v1331 = vpop.f32.mrb[0].mxu0
        %v1332 = vpop.f32.mrb[0].mxu0
        %v1333 = vadd.f32 %v1205, %v1332
        %v1334 = vpop.f32.mrb[0].mxu0
        %1335 = vmatprep.mubr.bf16.mxu0 0
        %1336 = vmatmul.mubr.bf16.gmra.mrb[0].mxu0 %v1180
        %v1337 = vpop.f32.mrb[0].mxu0
        %v1338 = vadd.f32 %v1205, %v1337
        %v1339 = vpop.f32.mrb[0].mxu0
        %v1340 = vpop.f32.mrb[0].mxu0
        %v1341 = vadd.f32 %v1205, %v1340
        %v1342 = vpop.f32.mrb[0].mxu0
        %1343 = vmatprep.mubr.bf16.mxu0 0
        %1344 = vmatmul.mubr.bf16.gmra.mrb[0].mxu0 %v1181
        %v1345 = vpop.f32.mrb[0].mxu0
        %v1346 = vadd.f32 %v1205, %v1345
        %v1347 = vpop.f32.mrb[0].mxu0
        %v1348 = vpop.f32.mrb[0].mxu0
        %v1349 = vadd.f32 %v1205, %v1348
        %v1350 = vpop.f32.mrb[0].mxu0
        %1351 = vdwg.mxu0
        %v1352 = vmax.f32 %v1290, 0.0
        %v1353 = vmax.f32 %v1293, 0.0
        %v1354 = vmax.f32 %v1298, 0.0
        %v1355 = vmax.f32 %v1301, 0.0
        %v1356 = vmax.f32 %v1306, 0.0
        %v1357 = vmax.f32 %v1309, 0.0
        %v1358 = vmax.f32 %v1314, 0.0
        %v1359 = vmax.f32 %v1317, 0.0
        %v1360 = vmax.f32 %v1322, 0.0
        %v1361 = vmax.f32 %v1325, 0.0
        %v1362 = vmax.f32 %v1330, 0.0
        %v1363 = vmax.f32 %v1333, 0.0
        %v1364 = vmax.f32 %v1338, 0.0
        %v1365 = vmax.f32 %v1341, 0.0
        %v1366 = vmax.f32 %v1346, 0.0
        %v1367 = vmax.f32 %v1349, 0.0
        %v1368 = vpack.c.bf16 %v1353, %v1352
        %v1369 = vpack.c.bf16 %v1355, %v1354
        %v1370 = vpack.c.bf16 %v1357, %v1356
        %v1371 = vpack.c.bf16 %v1359, %v1358
        %v1372 = vpack.c.bf16 %v1361, %v1360
        %v1373 = vpack.c.bf16 %v1363, %v1362
        %v1374 = vpack.c.bf16 %v1365, %v1364
        %v1375 = vpack.c.bf16 %v1367, %v1366
        %s1376 = scalar_lea.vmem [#allocation8], 64
        %v1377 = vld [vmem:[%s1376] sm:$0xf]
        %v1378 = vld [vmem:[%s1376 + $0x4] sm:$0xf]
        %v1379 = vld [vmem:[%s1376 + $0x8] sm:$0xf]
        %v1380 = vld [vmem:[%s1376 + $0xc] sm:$0xf]
        %v1381 = vld [vmem:[%s1376 + $0x10] sm:$0xf]
        %v1382 = vld [vmem:[%s1376 + $0x14] sm:$0xf]
        %v1383 = vld [vmem:[%s1376 + $0x18] sm:$0xf]
        %v1384 = vld [vmem:[%s1376 + $0x1c] sm:$0xf]
        %v1385 = vld [vmem:[%s1376 + $0x20] sm:$0xf]
        %v1386 = vld [vmem:[%s1376 + $0x24] sm:$0xf]
        %v1387 = vld [vmem:[%s1376 + $0x28] sm:$0xf]
        %v1388 = vld [vmem:[%s1376 + $0x2c] sm:$0xf]
        %v1389 = vld [vmem:[%s1376 + $0x30] sm:$0xf]
        %v1390 = vld [vmem:[%s1376 + $0x34] sm:$0xf]
        %v1391 = vld [vmem:[%s1376 + $0x38] sm:$0xf]
        %v1392 = vld [vmem:[%s1376 + $0x3c] sm:$0xf]
        %v1409 = vunpack.c.l.b16 %v1377
        %v1410 = vunpack.c.l.b16 %v1378
        %v1411 = vunpack.c.l.b16 %v1379
        %v1412 = vunpack.c.l.b16 %v1380
        %v1413 = vunpack.c.l.b16 %v1381
        %v1414 = vunpack.c.l.b16 %v1382
        %v1415 = vunpack.c.l.b16 %v1383
        %v1416 = vunpack.c.l.b16 %v1384
        %v1417 = vunpack.c.l.b16 %v1385
        %v1418 = vunpack.c.l.b16 %v1386
        %v1419 = vunpack.c.l.b16 %v1387
        %v1420 = vunpack.c.l.b16 %v1388
        %v1421 = vunpack.c.l.b16 %v1389
        %v1422 = vunpack.c.l.b16 %v1390
        %v1423 = vunpack.c.l.b16 %v1391
        %v1424 = vunpack.c.l.b16 %v1392
        %v1425 = vpack.c.b16 %v1410, %v1409
        %v1426 = vpack.c.b16 %v1412, %v1411
        %v1427 = vpack.c.b16 %v1414, %v1413
        %v1428 = vpack.c.b16 %v1416, %v1415
        %v1429 = vpack.c.b16 %v1418, %v1417
        %v1430 = vpack.c.b16 %v1420, %v1419
        %v1431 = vpack.c.b16 %v1422, %v1421
        %v1432 = vpack.c.b16 %v1424, %v1423
        %1441 = vmatprep.subr.bf16.mxu0 0
        %1442 = vmatpush1.bf16.msra.mxu0 %v1425
        %1443 = vmatprep.subr.bf16.mxu0 0
        %1444 = vmatpush1.bf16.msra.mxu0 %v1426
        %1445 = vmatprep.subr.bf16.mxu0 0
        %1446 = vmatpush1.bf16.msra.mxu0 %v1427
        %1447 = vmatprep.subr.bf16.mxu0 0
        %1448 = vmatpush1.bf16.msra.mxu0 %v1428
        %1449 = vmatprep.subr.bf16.mxu0 0
        %1450 = vmatpush1.bf16.msra.mxu0 %v1429
        %1451 = vmatprep.subr.bf16.mxu0 0
        %1452 = vmatpush1.bf16.msra.mxu0 %v1430
        %1453 = vmatprep.subr.bf16.mxu0 0
        %1454 = vmatpush1.bf16.msra.mxu0 %v1431
        %1455 = vmatprep.subr.bf16.mxu0 0
        %1456 = vmatpush1.bf16.msra.mxu0 %v1432
        %1457 = vmatprep.subr.bf16.mxu0 0
        %1458 = vmatpush1.bf16.msra.mxu0 0
        %1459 = vmatprep.subr.bf16.mxu0 0
        %1460 = vmatpush1.bf16.msra.mxu0 0
        %1461 = vmatprep.subr.bf16.mxu0 0
        %1462 = vmatpush1.bf16.msra.mxu0 0
        %1463 = vmatprep.subr.bf16.mxu0 0
        %1464 = vmatpush1.bf16.msra.mxu0 0
        %1465 = vmatprep.subr.bf16.mxu0 0
        %1466 = vmatpush1.bf16.msra.mxu0 0
        %1467 = vmatprep.subr.bf16.mxu0 0
        %1468 = vmatpush1.bf16.msra.mxu0 0
        %1469 = vmatprep.subr.bf16.mxu0 0
        %1470 = vmatpush1.bf16.msra.mxu0 0
        %1471 = vmatprep.subr.bf16.mxu0 0
        %1472 = vmatpush1.bf16.msra.mxu0 0
        %1473 = vmatprep.mubr.bf16.mxu0 0
        %1474 = vmatmul.mubr.bf16.gmra.mrb[0].mxu0 %v1368
        %v1475 = vpop.f32.mrb[0].mxu0
        %v1476 = vadd.f32 0.0, %v1475
        %v1477 = vpop.f32.mrb[0].mxu0
        %v1478 = vpop.f32.mrb[0].mxu0
        %v1479 = vadd.f32 0.0, %v1478
        %v1480 = vpop.f32.mrb[0].mxu0
        %1481 = vmatprep.mubr.bf16.mxu0 0
        %1482 = vmatmul.mubr.bf16.gmra.mrb[0].mxu0 %v1369
        %v1483 = vpop.f32.mrb[0].mxu0
        %v1484 = vadd.f32 0.0, %v1483
        %v1485 = vpop.f32.mrb[0].mxu0
        %v1486 = vpop.f32.mrb[0].mxu0
        %v1487 = vadd.f32 0.0, %v1486
        %v1488 = vpop.f32.mrb[0].mxu0
        %1489 = vmatprep.mubr.bf16.mxu0 0
        %1490 = vmatmul.mubr.bf16.gmra.mrb[0].mxu0 %v1370
        %v1491 = vpop.f32.mrb[0].mxu0
        %v1492 = vadd.f32 0.0, %v1491
        %v1493 = vpop.f32.mrb[0].mxu0
        %v1494 = vpop.f32.mrb[0].mxu0
        %v1495 = vadd.f32 0.0, %v1494
        %v1496 = vpop.f32.mrb[0].mxu0
        %1497 = vmatprep.mubr.bf16.mxu0 0
        %1498 = vmatmul.mubr.bf16.gmra.mrb[0].mxu0 %v1371
        %v1499 = vpop.f32.mrb[0].mxu0
        %v1500 = vadd.f32 0.0, %v1499
        %v1501 = vpop.f32.mrb[0].mxu0
        %v1502 = vpop.f32.mrb[0].mxu0
        %v1503 = vadd.f32 0.0, %v1502
        %v1504 = vpop.f32.mrb[0].mxu0
        %1505 = vmatprep.mubr.bf16.mxu0 0
        %1506 = vmatmul.mubr.bf16.gmra.mrb[0].mxu0 %v1372
        %v1507 = vpop.f32.mrb[0].mxu0
        %v1508 = vadd.f32 0.0, %v1507
        %v1509 = vpop.f32.mrb[0].mxu0
        %v1510 = vpop.f32.mrb[0].mxu0
        %v1511 = vadd.f32 0.0, %v1510
        %v1512 = vpop.f32.mrb[0].mxu0
        %1513 = vmatprep.mubr.bf16.mxu0 0
        %1514 = vmatmul.mubr.bf16.gmra.mrb[0].mxu0 %v1373
        %v1515 = vpop.f32.mrb[0].mxu0
        %v1516 = vadd.f32 0.0, %v1515
        %v1517 = vpop.f32.mrb[0].mxu0
        %v1518 = vpop.f32.mrb[0].mxu0
        %v1519 = vadd.f32 0.0, %v1518
        %v1520 = vpop.f32.mrb[0].mxu0
        %1521 = vmatprep.mubr.bf16.mxu0 0
        %1522 = vmatmul.mubr.bf16.gmra.mrb[0].mxu0 %v1374
        %v1523 = vpop.f32.mrb[0].mxu0
        %v1524 = vadd.f32 0.0, %v1523
        %v1525 = vpop.f32.mrb[0].mxu0
        %v1526 = vpop.f32.mrb[0].mxu0
        %v1527 = vadd.f32 0.0, %v1526
        %v1528 = vpop.f32.mrb[0].mxu0
        %1529 = vmatprep.mubr.bf16.mxu0 0
        %1530 = vmatmul.mubr.bf16.gmra.mrb[0].mxu0 %v1375
        %v1531 = vpop.f32.mrb[0].mxu0
        %v1532 = vadd.f32 0.0, %v1531
        %v1533 = vpop.f32.mrb[0].mxu0
        %v1534 = vpop.f32.mrb[0].mxu0
        %v1535 = vadd.f32 0.0, %v1534
        %v1536 = vpop.f32.mrb[0].mxu0
        %1537 = vdwg.mxu0
        %v1538 = vadd.f32 %v1158, %v1476
        %v1539 = vadd.f32 %v1159, %v1479
        %v1540 = vadd.f32 %v1160, %v1484
        %v1541 = vadd.f32 %v1161, %v1487
        %v1542 = vadd.f32 %v1162, %v1492
        %v1543 = vadd.f32 %v1163, %v1495
        %v1544 = vadd.f32 %v1164, %v1500
        %v1545 = vadd.f32 %v1165, %v1503
        %v1546 = vadd.f32 %v1166, %v1508
        %v1547 = vadd.f32 %v1167, %v1511
        %v1548 = vadd.f32 %v1168, %v1516
        %v1549 = vadd.f32 %v1169, %v1519
        %v1550 = vadd.f32 %v1170, %v1524
        %v1551 = vadd.f32 %v1171, %v1527
        %v1552 = vadd.f32 %v1172, %v1532
        %v1553 = vadd.f32 %v1173, %v1535
        %s1554 = scalar_lea.vmem %s6, 1
        %v1555 = vld [vmem:[%s1554] sm:$0x1]
        %v1557 = vlaneseq
        %v1558 = vshrl.u32 %v1557, 7
        %v1559 = vsub.s32 0, %v1558
        %v1560 = vrot.slane %v1555, %v1559
        %v1562 = vadd.f32 %v1538, %v1560
        %v1563 = vadd.f32 %v1539, %v1560
        %v1564 = vadd.f32 %v1540, %v1560
        %v1565 = vadd.f32 %v1541, %v1560
        %v1566 = vadd.f32 %v1542, %v1560
        %v1567 = vadd.f32 %v1543, %v1560
        %v1568 = vadd.f32 %v1544, %v1560
        %v1569 = vadd.f32 %v1545, %v1560
        %v1570 = vadd.f32 %v1546, %v1560
        %v1571 = vadd.f32 %v1547, %v1560
        %v1572 = vadd.f32 %v1548, %v1560
        %v1573 = vadd.f32 %v1549, %v1560
        %v1574 = vadd.f32 %v1550, %v1560
        %v1575 = vadd.f32 %v1551, %v1560
        %v1576 = vadd.f32 %v1552, %v1560
        %v1577 = vadd.f32 %v1553, %v1560
        %v1578 = vpack.c.bf16 %v1563, %v1562
        %v1579 = vpack.c.bf16 %v1565, %v1564
        %v1580 = vpack.c.bf16 %v1567, %v1566
        %v1581 = vpack.c.bf16 %v1569, %v1568
        %v1582 = vpack.c.bf16 %v1571, %v1570
        %v1583 = vpack.c.bf16 %v1573, %v1572
        %v1584 = vpack.c.bf16 %v1575, %v1574
        %v1585 = vpack.c.bf16 %v1577, %v1576
        %s1586 = scalar_lea.vmem [#allocation7], 128
        %v1587 = vld [vmem:[%s1586] sm:$0xf]
        %v1588 = vld [vmem:[%s1586 + $0x4] sm:$0xf]
        %v1589 = vld [vmem:[%s1586 + $0x8] sm:$0xf]
        %v1590 = vld [vmem:[%s1586 + $0xc] sm:$0xf]
        %v1591 = vld [vmem:[%s1586 + $0x10] sm:$0xf]
        %v1592 = vld [vmem:[%s1586 + $0x14] sm:$0xf]
        %v1593 = vld [vmem:[%s1586 + $0x18] sm:$0xf]
        %v1594 = vld [vmem:[%s1586 + $0x1c] sm:$0xf]
        %v1595 = vld [vmem:[%s1586 + $0x20] sm:$0xf]
        %v1596 = vld [vmem:[%s1586 + $0x24] sm:$0xf]
        %v1597 = vld [vmem:[%s1586 + $0x28] sm:$0xf]
        %v1598 = vld [vmem:[%s1586 + $0x2c] sm:$0xf]
        %v1599 = vld [vmem:[%s1586 + $0x30] sm:$0xf]
        %v1600 = vld [vmem:[%s1586 + $0x34] sm:$0xf]
        %v1601 = vld [vmem:[%s1586 + $0x38] sm:$0xf]
        %v1602 = vld [vmem:[%s1586 + $0x3c] sm:$0xf]
        %s1603 = scalar_lea.vmem %s4, 2
        %v1604 = vld [vmem:[%s1603] sm:$0x1]
        %v1606 = vlaneseq
        %v1607 = vshrl.u32 %v1606, 7
        %v1608 = vsub.s32 0, %v1607
        %v1609 = vrot.slane %v1604, %v1608
        %v1627 = vunpack.c.l.b16 %v1587
        %v1628 = vunpack.c.l.b16 %v1588
        %v1629 = vunpack.c.l.b16 %v1589
        %v1630 = vunpack.c.l.b16 %v1590
        %v1631 = vunpack.c.l.b16 %v1591
        %v1632 = vunpack.c.l.b16 %v1592
        %v1633 = vunpack.c.l.b16 %v1593
        %v1634 = vunpack.c.l.b16 %v1594
        %v1635 = vunpack.c.l.b16 %v1595
        %v1636 = vunpack.c.l.b16 %v1596
        %v1637 = vunpack.c.l.b16 %v1597
        %v1638 = vunpack.c.l.b16 %v1598
        %v1639 = vunpack.c.l.b16 %v1599
        %v1640 = vunpack.c.l.b16 %v1600
        %v1641 = vunpack.c.l.b16 %v1601
        %v1642 = vunpack.c.l.b16 %v1602
        %v1643 = vpack.c.b16 %v1628, %v1627
        %v1644 = vpack.c.b16 %v1630, %v1629
        %v1645 = vpack.c.b16 %v1632, %v1631
        %v1646 = vpack.c.b16 %v1634, %v1633
        %v1647 = vpack.c.b16 %v1636, %v1635
        %v1648 = vpack.c.b16 %v1638, %v1637
        %v1649 = vpack.c.b16 %v1640, %v1639
        %v1650 = vpack.c.b16 %v1642, %v1641
        %1659 = vmatprep.subr.bf16.mxu0 0
        %1660 = vmatpush1.bf16.msra.mxu0 %v1643
        %1661 = vmatprep.subr.bf16.mxu0 0
        %1662 = vmatpush1.bf16.msra.mxu0 %v1644
        %1663 = vmatprep.subr.bf16.mxu0 0
        %1664 = vmatpush1.bf16.msra.mxu0 %v1645
        %1665 = vmatprep.subr.bf16.mxu0 0
        %1666 = vmatpush1.bf16.msra.mxu0 %v1646
        %1667 = vmatprep.subr.bf16.mxu0 0
        %1668 = vmatpush1.bf16.msra.mxu0 %v1647
        %1669 = vmatprep.subr.bf16.mxu0 0
        %1670 = vmatpush1.bf16.msra.mxu0 %v1648
        %1671 = vmatprep.subr.bf16.mxu0 0
        %1672 = vmatpush1.bf16.msra.mxu0 %v1649
        %1673 = vmatprep.subr.bf16.mxu0 0
        %1674 = vmatpush1.bf16.msra.mxu0 %v1650
        %1675 = vmatprep.subr.bf16.mxu0 0
        %1676 = vmatpush1.bf16.msra.mxu0 0
        %1677 = vmatprep.subr.bf16.mxu0 0
        %1678 = vmatpush1.bf16.msra.mxu0 0
        %1679 = vmatprep.subr.bf16.mxu0 0
        %1680 = vmatpush1.bf16.msra.mxu0 0
        %1681 = vmatprep.subr.bf16.mxu0 0
        %1682 = vmatpush1.bf16.msra.mxu0 0
        %1683 = vmatprep.subr.bf16.mxu0 0
        %1684 = vmatpush1.bf16.msra.mxu0 0
        %1685 = vmatprep.subr.bf16.mxu0 0
        %1686 = vmatpush1.bf16.msra.mxu0 0
        %1687 = vmatprep.subr.bf16.mxu0 0
        %1688 = vmatpush1.bf16.msra.mxu0 0
        %1689 = vmatprep.subr.bf16.mxu0 0
        %1690 = vmatpush1.bf16.msra.mxu0 0
        %1691 = vmatprep.mubr.bf16.mxu0 0
        %1692 = vmatmul.mubr.bf16.gmra.mrb[0].mxu0 %v1578
        %v1693 = vpop.f32.mrb[0].mxu0
        %v1694 = vadd.f32 %v1609, %v1693
        %v1695 = vpop.f32.mrb[0].mxu0
        %v1696 = vpop.f32.mrb[0].mxu0
        %v1697 = vadd.f32 %v1609, %v1696
        %v1698 = vpop.f32.mrb[0].mxu0
        %1699 = vmatprep.mubr.bf16.mxu0 0
        %1700 = vmatmul.mubr.bf16.gmra.mrb[0].mxu0 %v1579
        %v1701 = vpop.f32.mrb[0].mxu0
        %v1702 = vadd.f32 %v1609, %v1701
        %v1703 = vpop.f32.mrb[0].mxu0
        %v1704 = vpop.f32.mrb[0].mxu0
        %v1705 = vadd.f32 %v1609, %v1704
        %v1706 = vpop.f32.mrb[0].mxu0
        %1707 = vmatprep.mubr.bf16.mxu0 0
        %1708 = vmatmul.mubr.bf16.gmra.mrb[0].mxu0 %v1580
        %v1709 = vpop.f32.mrb[0].mxu0
        %v1710 = vadd.f32 %v1609, %v1709
        %v1711 = vpop.f32.mrb[0].mxu0
        %v1712 = vpop.f32.mrb[0].mxu0
        %v1713 = vadd.f32 %v1609, %v1712
        %v1714 = vpop.f32.mrb[0].mxu0
        %1715 = vmatprep.mubr.bf16.mxu0 0
        %1716 = vmatmul.mubr.bf16.gmra.mrb[0].mxu0 %v1581
        %v1717 = vpop.f32.mrb[0].mxu0
        %v1718 = vadd.f32 %v1609, %v1717
        %v1719 = vpop.f32.mrb[0].mxu0
        %v1720 = vpop.f32.mrb[0].mxu0
        %v1721 = vadd.f32 %v1609, %v1720
        %v1722 = vpop.f32.mrb[0].mxu0
        %1723 = vmatprep.mubr.bf16.mxu0 0
        %1724 = vmatmul.mubr.bf16.gmra.mrb[0].mxu0 %v1582
        %v1725 = vpop.f32.mrb[0].mxu0
        %v1726 = vadd.f32 %v1609, %v1725
        %v1727 = vpop.f32.mrb[0].mxu0
        %v1728 = vpop.f32.mrb[0].mxu0
        %v1729 = vadd.f32 %v1609, %v1728
        %v1730 = vpop.f32.mrb[0].mxu0
        %1731 = vmatprep.mubr.bf16.mxu0 0
        %1732 = vmatmul.mubr.bf16.gmra.mrb[0].mxu0 %v1583
        %v1733 = vpop.f32.mrb[0].mxu0
        %v1734 = vadd.f32 %v1609, %v1733
        %v1735 = vpop.f32.mrb[0].mxu0
        %v1736 = vpop.f32.mrb[0].mxu0
        %v1737 = vadd.f32 %v1609, %v1736
        %v1738 = vpop.f32.mrb[0].mxu0
        %1739 = vmatprep.mubr.bf16.mxu0 0
        %1740 = vmatmul.mubr.bf16.gmra.mrb[0].mxu0 %v1584
        %v1741 = vpop.f32.mrb[0].mxu0
        %v1742 = vadd.f32 %v1609, %v1741
        %v1743 = vpop.f32.mrb[0].mxu0
        %v1744 = vpop.f32.mrb[0].mxu0
        %v1745 = vadd.f32 %v1609, %v1744
        %v1746 = vpop.f32.mrb[0].mxu0
        %1747 = vmatprep.mubr.bf16.mxu0 0
        %1748 = vmatmul.mubr.bf16.gmra.mrb[0].mxu0 %v1585
        %v1749 = vpop.f32.mrb[0].mxu0
        %v1750 = vadd.f32 %v1609, %v1749
        %v1751 = vpop.f32.mrb[0].mxu0
        %v1752 = vpop.f32.mrb[0].mxu0
        %v1753 = vadd.f32 %v1609, %v1752
        %v1754 = vpop.f32.mrb[0].mxu0
        %1755 = vdwg.mxu0
        %v1756 = vmax.f32 %v1694, 0.0
        %v1757 = vmax.f32 %v1697, 0.0
        %v1758 = vmax.f32 %v1702, 0.0
        %v1759 = vmax.f32 %v1705, 0.0
        %v1760 = vmax.f32 %v1710, 0.0
        %v1761 = vmax.f32 %v1713, 0.0
        %v1762 = vmax.f32 %v1718, 0.0
        %v1763 = vmax.f32 %v1721, 0.0
        %v1764 = vmax.f32 %v1726, 0.0
        %v1765 = vmax.f32 %v1729, 0.0
        %v1766 = vmax.f32 %v1734, 0.0
        %v1767 = vmax.f32 %v1737, 0.0
        %v1768 = vmax.f32 %v1742, 0.0
        %v1769 = vmax.f32 %v1745, 0.0
        %v1770 = vmax.f32 %v1750, 0.0
        %v1771 = vmax.f32 %v1753, 0.0
        %v1772 = vpack.c.bf16 %v1757, %v1756
        %v1773 = vpack.c.bf16 %v1759, %v1758
        %v1774 = vpack.c.bf16 %v1761, %v1760
        %v1775 = vpack.c.bf16 %v1763, %v1762
        %v1776 = vpack.c.bf16 %v1765, %v1764
        %v1777 = vpack.c.bf16 %v1767, %v1766
        %v1778 = vpack.c.bf16 %v1769, %v1768
        %v1779 = vpack.c.bf16 %v1771, %v1770
        %s1780 = scalar_lea.vmem [#allocation8], 128
        %v1781 = vld [vmem:[%s1780] sm:$0xf]
        %v1782 = vld [vmem:[%s1780 + $0x4] sm:$0xf]
        %v1783 = vld [vmem:[%s1780 + $0x8] sm:$0xf]
        %v1784 = vld [vmem:[%s1780 + $0xc] sm:$0xf]
        %v1785 = vld [vmem:[%s1780 + $0x10] sm:$0xf]
        %v1786 = vld [vmem:[%s1780 + $0x14] sm:$0xf]
        %v1787 = vld [vmem:[%s1780 + $0x18] sm:$0xf]
        %v1788 = vld [vmem:[%s1780 + $0x1c] sm:$0xf]
        %v1789 = vld [vmem:[%s1780 + $0x20] sm:$0xf]
        %v1790 = vld [vmem:[%s1780 + $0x24] sm:$0xf]
        %v1791 = vld [vmem:[%s1780 + $0x28] sm:$0xf]
        %v1792 = vld [vmem:[%s1780 + $0x2c] sm:$0xf]
        %v1793 = vld [vmem:[%s1780 + $0x30] sm:$0xf]
        %v1794 = vld [vmem:[%s1780 + $0x34] sm:$0xf]
        %v1795 = vld [vmem:[%s1780 + $0x38] sm:$0xf]
        %v1796 = vld [vmem:[%s1780 + $0x3c] sm:$0xf]
        %v1813 = vunpack.c.l.b16 %v1781
        %v1814 = vunpack.c.l.b16 %v1782
        %v1815 = vunpack.c.l.b16 %v1783
        %v1816 = vunpack.c.l.b16 %v1784
        %v1817 = vunpack.c.l.b16 %v1785
        %v1818 = vunpack.c.l.b16 %v1786
        %v1819 = vunpack.c.l.b16 %v1787
        %v1820 = vunpack.c.l.b16 %v1788
        %v1821 = vunpack.c.l.b16 %v1789
        %v1822 = vunpack.c.l.b16 %v1790
        %v1823 = vunpack.c.l.b16 %v1791
        %v1824 = vunpack.c.l.b16 %v1792
        %v1825 = vunpack.c.l.b16 %v1793
        %v1826 = vunpack.c.l.b16 %v1794
        %v1827 = vunpack.c.l.b16 %v1795
        %v1828 = vunpack.c.l.b16 %v1796
        %v1829 = vpack.c.b16 %v1814, %v1813
        %v1830 = vpack.c.b16 %v1816, %v1815
        %v1831 = vpack.c.b16 %v1818, %v1817
        %v1832 = vpack.c.b16 %v1820, %v1819
        %v1833 = vpack.c.b16 %v1822, %v1821
        %v1834 = vpack.c.b16 %v1824, %v1823
        %v1835 = vpack.c.b16 %v1826, %v1825
        %v1836 = vpack.c.b16 %v1828, %v1827
        %1845 = vmatprep.subr.bf16.mxu0 0
        %1846 = vmatpush1.bf16.msra.mxu0 %v1829
        %1847 = vmatprep.subr.bf16.mxu0 0
        %1848 = vmatpush1.bf16.msra.mxu0 %v1830
        %1849 = vmatprep.subr.bf16.mxu0 0
        %1850 = vmatpush1.bf16.msra.mxu0 %v1831
        %1851 = vmatprep.subr.bf16.mxu0 0
        %1852 = vmatpush1.bf16.msra.mxu0 %v1832
        %1853 = vmatprep.subr.bf16.mxu0 0
        %1854 = vmatpush1.bf16.msra.mxu0 %v1833
        %1855 = vmatprep.subr.bf16.mxu0 0
        %1856 = vmatpush1.bf16.msra.mxu0 %v1834
        %1857 = vmatprep.subr.bf16.mxu0 0
        %1858 = vmatpush1.bf16.msra.mxu0 %v1835
        %1859 = vmatprep.subr.bf16.mxu0 0
        %1860 = vmatpush1.bf16.msra.mxu0 %v1836
        %1861 = vmatprep.subr.bf16.mxu0 0
        %1862 = vmatpush1.bf16.msra.mxu0 0
        %1863 = vmatprep.subr.bf16.mxu0 0
        %1864 = vmatpush1.bf16.msra.mxu0 0
        %1865 = vmatprep.subr.bf16.mxu0 0
        %1866 = vmatpush1.bf16.msra.mxu0 0
        %1867 = vmatprep.subr.bf16.mxu0 0
        %1868 = vmatpush1.bf16.msra.mxu0 0
        %1869 = vmatprep.subr.bf16.mxu0 0
        %1870 = vmatpush1.bf16.msra.mxu0 0
        %1871 = vmatprep.subr.bf16.mxu0 0
        %1872 = vmatpush1.bf16.msra.mxu0 0
        %1873 = vmatprep.subr.bf16.mxu0 0
        %1874 = vmatpush1.bf16.msra.mxu0 0
        %1875 = vmatprep.subr.bf16.mxu0 0
        %1876 = vmatpush1.bf16.msra.mxu0 0
        %1877 = vmatprep.mubr.bf16.mxu0 0
        %1878 = vmatmul.mubr.bf16.gmra.mrb[0].mxu0 %v1772
        %v1879 = vpop.f32.mrb[0].mxu0
        %v1880 = vadd.f32 0.0, %v1879
        %v1881 = vpop.f32.mrb[0].mxu0
        %v1882 = vpop.f32.mrb[0].mxu0
        %v1883 = vadd.f32 0.0, %v1882
        %v1884 = vpop.f32.mrb[0].mxu0
        %1885 = vmatprep.mubr.bf16.mxu0 0
        %1886 = vmatmul.mubr.bf16.gmra.mrb[0].mxu0 %v1773
        %v1887 = vpop.f32.mrb[0].mxu0
        %v1888 = vadd.f32 0.0, %v1887
        %v1889 = vpop.f32.mrb[0].mxu0
        %v1890 = vpop.f32.mrb[0].mxu0
        %v1891 = vadd.f32 0.0, %v1890
        %v1892 = vpop.f32.mrb[0].mxu0
        %1893 = vmatprep.mubr.bf16.mxu0 0
        %1894 = vmatmul.mubr.bf16.gmra.mrb[0].mxu0 %v1774
        %v1895 = vpop.f32.mrb[0].mxu0
        %v1896 = vadd.f32 0.0, %v1895
        %v1897 = vpop.f32.mrb[0].mxu0
        %v1898 = vpop.f32.mrb[0].mxu0
        %v1899 = vadd.f32 0.0, %v1898
        %v1900 = vpop.f32.mrb[0].mxu0
        %1901 = vmatprep.mubr.bf16.mxu0 0
        %1902 = vmatmul.mubr.bf16.gmra.mrb[0].mxu0 %v1775
        %v1903 = vpop.f32.mrb[0].mxu0
        %v1904 = vadd.f32 0.0, %v1903
        %v1905 = vpop.f32.mrb[0].mxu0
        %v1906 = vpop.f32.mrb[0].mxu0
        %v1907 = vadd.f32 0.0, %v1906
        %v1908 = vpop.f32.mrb[0].mxu0
        %1909 = vmatprep.mubr.bf16.mxu0 0
        %1910 = vmatmul.mubr.bf16.gmra.mrb[0].mxu0 %v1776
        %v1911 = vpop.f32.mrb[0].mxu0
        %v1912 = vadd.f32 0.0, %v1911
        %v1913 = vpop.f32.mrb[0].mxu0
        %v1914 = vpop.f32.mrb[0].mxu0
        %v1915 = vadd.f32 0.0, %v1914
        %v1916 = vpop.f32.mrb[0].mxu0
        %1917 = vmatprep.mubr.bf16.mxu0 0
        %1918 = vmatmul.mubr.bf16.gmra.mrb[0].mxu0 %v1777
        %v1919 = vpop.f32.mrb[0].mxu0
        %v1920 = vadd.f32 0.0, %v1919
        %v1921 = vpop.f32.mrb[0].mxu0
        %v1922 = vpop.f32.mrb[0].mxu0
        %v1923 = vadd.f32 0.0, %v1922
        %v1924 = vpop.f32.mrb[0].mxu0
        %1925 = vmatprep.mubr.bf16.mxu0 0
        %1926 = vmatmul.mubr.bf16.gmra.mrb[0].mxu0 %v1778
        %v1927 = vpop.f32.mrb[0].mxu0
        %v1928 = vadd.f32 0.0, %v1927
        %v1929 = vpop.f32.mrb[0].mxu0
        %v1930 = vpop.f32.mrb[0].mxu0
        %v1931 = vadd.f32 0.0, %v1930
        %v1932 = vpop.f32.mrb[0].mxu0
        %1933 = vmatprep.mubr.bf16.mxu0 0
        %1934 = vmatmul.mubr.bf16.gmra.mrb[0].mxu0 %v1779
        %v1935 = vpop.f32.mrb[0].mxu0
        %v1936 = vadd.f32 0.0, %v1935
        %v1937 = vpop.f32.mrb[0].mxu0
        %v1938 = vpop.f32.mrb[0].mxu0
        %v1939 = vadd.f32 0.0, %v1938
        %v1940 = vpop.f32.mrb[0].mxu0
        %1941 = vdwg.mxu0
        %v1942 = vadd.f32 %v1562, %v1880
        %v1943 = vadd.f32 %v1563, %v1883
        %v1944 = vadd.f32 %v1564, %v1888
        %v1945 = vadd.f32 %v1565, %v1891
        %v1946 = vadd.f32 %v1566, %v1896
        %v1947 = vadd.f32 %v1567, %v1899
        %v1948 = vadd.f32 %v1568, %v1904
        %v1949 = vadd.f32 %v1569, %v1907
        %v1950 = vadd.f32 %v1570, %v1912
        %v1951 = vadd.f32 %v1571, %v1915
        %v1952 = vadd.f32 %v1572, %v1920
        %v1953 = vadd.f32 %v1573, %v1923
        %v1954 = vadd.f32 %v1574, %v1928
        %v1955 = vadd.f32 %v1575, %v1931
        %v1956 = vadd.f32 %v1576, %v1936
        %v1957 = vadd.f32 %v1577, %v1939
        %s1958 = scalar_lea.vmem %s6, 2
        %v1959 = vld [vmem:[%s1958] sm:$0x1]
        %v1961 = vlaneseq
        %v1962 = vshrl.u32 %v1961, 7
        %v1963 = vsub.s32 0, %v1962
        %v1964 = vrot.slane %v1959, %v1963
        %v1966 = vadd.f32 %v1942, %v1964
        %v1967 = vadd.f32 %v1943, %v1964
        %v1968 = vadd.f32 %v1944, %v1964
        %v1969 = vadd.f32 %v1945, %v1964
        %v1970 = vadd.f32 %v1946, %v1964
        %v1971 = vadd.f32 %v1947, %v1964
        %v1972 = vadd.f32 %v1948, %v1964
        %v1973 = vadd.f32 %v1949, %v1964
        %v1974 = vadd.f32 %v1950, %v1964
        %v1975 = vadd.f32 %v1951, %v1964
        %v1976 = vadd.f32 %v1952, %v1964
        %v1977 = vadd.f32 %v1953, %v1964
        %v1978 = vadd.f32 %v1954, %v1964
        %v1979 = vadd.f32 %v1955, %v1964
        %v1980 = vadd.f32 %v1956, %v1964
        %v1981 = vadd.f32 %v1957, %v1964
        %v1982 = vpack.c.bf16 %v1967, %v1966
        %v1983 = vpack.c.bf16 %v1969, %v1968
        %v1984 = vpack.c.bf16 %v1971, %v1970
        %v1985 = vpack.c.bf16 %v1973, %v1972
        %v1986 = vpack.c.bf16 %v1975, %v1974
        %v1987 = vpack.c.bf16 %v1977, %v1976
        %v1988 = vpack.c.bf16 %v1979, %v1978
        %v1989 = vpack.c.bf16 %v1981, %v1980
        %v1990 = vld [vmem:[#allocation10] sm:$0xf]
        %v1991 = vld [vmem:[#allocation10 + $0x4] sm:$0xf]
        %v1992 = vld [vmem:[#allocation10 + $0x8] sm:$0xf]
        %v1993 = vld [vmem:[#allocation10 + $0xc] sm:$0xf]
        %v1994 = vld [vmem:[#allocation10 + $0x10] sm:$0xf]
        %v1995 = vld [vmem:[#allocation10 + $0x14] sm:$0xf]
        %v1996 = vld [vmem:[#allocation10 + $0x18] sm:$0xf]
        %v1997 = vld [vmem:[#allocation10 + $0x1c] sm:$0xf]
        %v1998 = vld [vmem:[#allocation10 + $0x20] sm:$0xf]
        %v1999 = vld [vmem:[#allocation10 + $0x24] sm:$0xf]
        %v2000 = vld [vmem:[#allocation10 + $0x28] sm:$0xf]
        %v2001 = vld [vmem:[#allocation10 + $0x2c] sm:$0xf]
        %v2002 = vld [vmem:[#allocation10 + $0x30] sm:$0xf]
        %v2003 = vld [vmem:[#allocation10 + $0x34] sm:$0xf]
        %v2004 = vld [vmem:[#allocation10 + $0x38] sm:$0xf]
        %v2005 = vld [vmem:[#allocation10 + $0x3c] sm:$0xf]
        %v2006 = vld [vmem:[%s8] sm:$0x1]
        %v2008 = vlaneseq
        %v2009 = vshrl.u32 %v2008, 7
        %v2010 = vsub.s32 0, %v2009
        %v2011 = vrot.slane %v2006, %v2010
        %v2029 = vunpack.c.l.b16 %v1990
        %v2030 = vunpack.c.l.b16 %v1991
        %v2031 = vunpack.c.l.b16 %v1992
        %v2032 = vunpack.c.l.b16 %v1993
        %v2033 = vunpack.c.l.b16 %v1994
        %v2034 = vunpack.c.l.b16 %v1995
        %v2035 = vunpack.c.l.b16 %v1996
        %v2036 = vunpack.c.l.b16 %v1997
        %v2037 = vunpack.c.l.b16 %v1998
        %v2038 = vunpack.c.l.b16 %v1999
        %v2039 = vunpack.c.l.b16 %v2000
        %v2040 = vunpack.c.l.b16 %v2001
        %v2041 = vunpack.c.l.b16 %v2002
        %v2042 = vunpack.c.l.b16 %v2003
        %v2043 = vunpack.c.l.b16 %v2004
        %v2044 = vunpack.c.l.b16 %v2005
        %v2045 = vpack.c.b16 %v2030, %v2029
        %v2046 = vpack.c.b16 %v2032, %v2031
        %v2047 = vpack.c.b16 %v2034, %v2033
        %v2048 = vpack.c.b16 %v2036, %v2035
        %v2049 = vpack.c.b16 %v2038, %v2037
        %v2050 = vpack.c.b16 %v2040, %v2039
        %v2051 = vpack.c.b16 %v2042, %v2041
        %v2052 = vpack.c.b16 %v2044, %v2043
        %2061 = vmatprep.subr.bf16.mxu0 0
        %2062 = vmatpush1.bf16.msra.mxu0 %v2045
        %2063 = vmatprep.subr.bf16.mxu0 0
        %2064 = vmatpush1.bf16.msra.mxu0 %v2046
        %2065 = vmatprep.subr.bf16.mxu0 0
        %2066 = vmatpush1.bf16.msra.mxu0 %v2047
        %2067 = vmatprep.subr.bf16.mxu0 0
        %2068 = vmatpush1.bf16.msra.mxu0 %v2048
        %2069 = vmatprep.subr.bf16.mxu0 0
        %2070 = vmatpush1.bf16.msra.mxu0 %v2049
        %2071 = vmatprep.subr.bf16.mxu0 0
        %2072 = vmatpush1.bf16.msra.mxu0 %v2050
        %2073 = vmatprep.subr.bf16.mxu0 0
        %2074 = vmatpush1.bf16.msra.mxu0 %v2051
        %2075 = vmatprep.subr.bf16.mxu0 0
        %2076 = vmatpush1.bf16.msra.mxu0 %v2052
        %2077 = vmatprep.subr.bf16.mxu0 0
        %2078 = vmatpush1.bf16.msra.mxu0 0
        %2079 = vmatprep.subr.bf16.mxu0 0
        %2080 = vmatpush1.bf16.msra.mxu0 0
        %2081 = vmatprep.subr.bf16.mxu0 0
        %2082 = vmatpush1.bf16.msra.mxu0 0
        %2083 = vmatprep.subr.bf16.mxu0 0
        %2084 = vmatpush1.bf16.msra.mxu0 0
        %2085 = vmatprep.subr.bf16.mxu0 0
        %2086 = vmatpush1.bf16.msra.mxu0 0
        %2087 = vmatprep.subr.bf16.mxu0 0
        %2088 = vmatpush1.bf16.msra.mxu0 0
        %2089 = vmatprep.subr.bf16.mxu0 0
        %2090 = vmatpush1.bf16.msra.mxu0 0
        %2091 = vmatprep.subr.bf16.mxu0 0
        %2092 = vmatpush1.bf16.msra.mxu0 0
        %2093 = vmatprep.mubr.bf16.mxu0 0
        %2094 = vmatmul.mubr.bf16.gmra.mrb[0].mxu0 %v1982
        %v2095 = vpop.f32.mrb[0].mxu0
        %v2096 = vadd.f32 %v2011, %v2095
        %v2097 = vpop.f32.mrb[0].mxu0
        %v2098 = vpop.f32.mrb[0].mxu0
        %v2099 = vadd.f32 %v2011, %v2098
        %v2100 = vpop.f32.mrb[0].mxu0
        %2101 = vmatprep.mubr.bf16.mxu0 0
        %2102 = vmatmul.mubr.bf16.gmra.mrb[0].mxu0 %v1983
        %v2103 = vpop.f32.mrb[0].mxu0
        %v2104 = vadd.f32 %v2011, %v2103
        %v2105 = vpop.f32.mrb[0].mxu0
        %v2106 = vpop.f32.mrb[0].mxu0
        %v2107 = vadd.f32 %v2011, %v2106
        %v2108 = vpop.f32.mrb[0].mxu0
        %2109 = vmatprep.mubr.bf16.mxu0 0
        %2110 = vmatmul.mubr.bf16.gmra.mrb[0].mxu0 %v1984
        %v2111 = vpop.f32.mrb[0].mxu0
        %v2112 = vadd.f32 %v2011, %v2111
        %v2113 = vpop.f32.mrb[0].mxu0
        %v2114 = vpop.f32.mrb[0].mxu0
        %v2115 = vadd.f32 %v2011, %v2114
        %v2116 = vpop.f32.mrb[0].mxu0
        %2117 = vmatprep.mubr.bf16.mxu0 0
        %2118 = vmatmul.mubr.bf16.gmra.mrb[0].mxu0 %v1985
        %v2119 = vpop.f32.mrb[0].mxu0
        %v2120 = vadd.f32 %v2011, %v2119
        %v2121 = vpop.f32.mrb[0].mxu0
        %v2122 = vpop.f32.mrb[0].mxu0
        %v2123 = vadd.f32 %v2011, %v2122
        %v2124 = vpop.f32.mrb[0].mxu0
        %2125 = vmatprep.mubr.bf16.mxu0 0
        %2126 = vmatmul.mubr.bf16.gmra.mrb[0].mxu0 %v1986
        %v2127 = vpop.f32.mrb[0].mxu0
        %v2128 = vadd.f32 %v2011, %v2127
        %v2129 = vpop.f32.mrb[0].mxu0
        %v2130 = vpop.f32.mrb[0].mxu0
        %v2131 = vadd.f32 %v2011, %v2130
        %v2132 = vpop.f32.mrb[0].mxu0
        %2133 = vmatprep.mubr.bf16.mxu0 0
        %2134 = vmatmul.mubr.bf16.gmra.mrb[0].mxu0 %v1987
        %v2135 = vpop.f32.mrb[0].mxu0
        %v2136 = vadd.f32 %v2011, %v2135
        %v2137 = vpop.f32.mrb[0].mxu0
        %v2138 = vpop.f32.mrb[0].mxu0
        %v2139 = vadd.f32 %v2011, %v2138
        %v2140 = vpop.f32.mrb[0].mxu0
        %2141 = vmatprep.mubr.bf16.mxu0 0
        %2142 = vmatmul.mubr.bf16.gmra.mrb[0].mxu0 %v1988
        %v2143 = vpop.f32.mrb[0].mxu0
        %v2144 = vadd.f32 %v2011, %v2143
        %v2145 = vpop.f32.mrb[0].mxu0
        %v2146 = vpop.f32.mrb[0].mxu0
        %v2147 = vadd.f32 %v2011, %v2146
        %v2148 = vpop.f32.mrb[0].mxu0
        %2149 = vmatprep.mubr.bf16.mxu0 0
        %2150 = vmatmul.mubr.bf16.gmra.mrb[0].mxu0 %v1989
        %v2151 = vpop.f32.mrb[0].mxu0
        %v2152 = vadd.f32 %v2011, %v2151
        %v2153 = vpop.f32.mrb[0].mxu0
        %v2154 = vpop.f32.mrb[0].mxu0
        %v2155 = vadd.f32 %v2011, %v2154
        %v2156 = vpop.f32.mrb[0].mxu0
        %2157 = vdwg.mxu0
        %2158 = vxpose.xlu0.b32.start [1/16] %v2096, 128
        %2159 = vxpose.xlu0.b32.cont [2/16] %v2099, 128
        %2160 = vxpose.xlu0.b32.cont [3/16] %v2104, 128
        %2161 = vxpose.xlu0.b32.cont [4/16] %v2107, 128
        %2162 = vxpose.xlu0.b32.cont [5/16] %v2112, 128
        %2163 = vxpose.xlu0.b32.cont [6/16] %v2115, 128
        %2164 = vxpose.xlu0.b32.cont [7/16] %v2120, 128
        %2165 = vxpose.xlu0.b32.cont [8/16] %v2123, 128
        %2166 = vxpose.xlu0.b32.cont [9/16] %v2128, 128
        %2167 = vxpose.xlu0.b32.cont [10/16] %v2131, 128
        %2168 = vxpose.xlu0.b32.cont [11/16] %v2136, 128
        %2169 = vxpose.xlu0.b32.cont [12/16] %v2139, 128
        %2170 = vxpose.xlu0.b32.cont [13/16] %v2144, 128
        %2171 = vxpose.xlu0.b32.cont [14/16] %v2147, 128
        %2172 = vxpose.xlu0.b32.cont [15/16] %v2152, 128
        %2173 = vxpose.xlu0.b32.end [16/16] %v2155, 128
        %v2174 = vpop.trf.xlu0
        %v2175 = vpop.trf.xlu0
        %v2176 = vpop.trf.xlu0
        %v2177 = vpop.trf.xlu0
        %v2178 = vpop.trf.xlu0
        %v2179 = vpop.trf.xlu0
        %v2180 = vpop.trf.xlu0
        %v2181 = vpop.trf.xlu0
        %v2182 = vpop.trf.xlu0
        %v2183 = vpop.trf.xlu0
        %v2184 = vpop.trf.xlu0
        %v2185 = vpop.trf.xlu0
        %v2186 = vpop.trf.xlu0
        %v2187 = vpop.trf.xlu0
        %v2188 = vpop.trf.xlu0
        %v2189 = vpop.trf.xlu0
        %2190 = vst [vmem:[%s427] sm:$0xff] %v2174
        %2191 = vst [vmem:[%s427 + $0x8] sm:$0xff] %v2175
        %2192 = vst [vmem:[%s427 + $0x10] sm:$0xff] %v2176
        %2193 = vst [vmem:[%s427 + $0x18] sm:$0xff] %v2177
        %s2194 = sand.u32 %s246, 1
        %s2195 = scalar_lea.sflag [#allocation4], %s2194
        %s2196 = sand.u32 %s246, 1
        %s2197 = smul.addr %s2196, 32
        %s2198 = scalar_lea.vmem [#allocation11], %s2197
        // Predicated region
        $region77: #{tpu_custom_call.1} parent=55 // pred_check
          %p2199 = pneg %p256
        $region78: #{tpu_custom_call.1} parent=55 // pred_check_branch
          %2201 = sbr.rel (%p2199) target = $region80
        $region79: #{tpu_custom_call.1} parent=55 // pred_region
          %s2203 = ssub.s32 512, 512
          %2204 = vsyncadd %s2195, %s2203
          %s2205 = smul.addr %s32, 4
          %s2206 = sadd.s32 %s33, %s2205
          %s2207 = smul.addr %s2206, 128
          %s2208 = scalar_lea.hbm %s9, %s2207
          %s2209 = sshll.u32 %s2198, 4
          %s2210 = int_to_ptr.vmem [resolvable:$true] %s2209
          %2215 = dma.vmem_to_hbm [thread:$0]  %s2210, 512, %s2208, %s2195, 128, 128, 8
        $region80: #{tpu_custom_call.1} parent=55 // pred_fallthru
          _
      $region56: #{tpu_custom_call.1} parent=5 // pred_fallthru
        _
      %p2216 = scmp.le.s32.totalorder 2, %s23
      // Predicated region
      $region81: #{tpu_custom_call.1} parent=5 // pred_check
        %p2217 = pneg %p2216
      $region82: #{tpu_custom_call.1} parent=5 // pred_check_branch
        %2219 = sbr.rel (%p2217) target = $region84
      $region83: #{tpu_custom_call.1} parent=5 // pred_region
        %s2220 = ssub.s32 %s23, 2
        // Predicated region
        $region85: #{tpu_custom_call.1} parent=83 // pred_check
          %p2221 = pneg %p262
        $region86: #{tpu_custom_call.1} parent=83 // pred_check_branch
          %2223 = sbr.rel (%p2221) target = $region88
        $region87: #{tpu_custom_call.1} parent=83 // pred_region
          %s2224 = sand.u32 %s247, 1
          %s2225 = scalar_lea.sflag [#allocation4], %s2224
          %s2226 = sand.u32 %s247, 1
          %s2227 = smul.addr %s2226, 32
          %s2228 = scalar_lea.vmem [#allocation11], %s2227
          %2229 = dma.done %s2225, 512
        $region88: #{tpu_custom_call.1} parent=83 // pred_fallthru
          _
      $region84: #{tpu_custom_call.1} parent=5 // pred_fallthru
        _
    $region6: #{tpu_custom_call.1} parent=1 // loop_footer
      %s27 = sadd.s32 1, %s23
    $region7: #{tpu_custom_call.1} parent=1 // loop_footer_branch
      %22 = sbr.rel target = $region3
    $region8: #{tpu_custom_call.1} parent=1 // loop_exit
      _
    %2230 = vsyncpa [#allocation3], 1
    %s2231 = scalar_lea.sflag [#allocation3], 1
    %2232 = vsyncpa %s2231, 1
    %2233 = vsyncpa [#allocation6], 1
    %2234 = vsyncpa [#allocation9], 1
    %2235 = vsyncpa [#allocation4], 1
    %s2236 = scalar_lea.sflag [#allocation4], 1
    %2237 = vsyncpa %s2236, 1

</llo_original>
